<compile_context>
chip_gen: v7x
topology: tpu7x:2x2x1
jax: 0.10.0
libtpu: 0.0.40
codegen_flags: <defaults>
</compile_context>

<pallas_src>
import functools
import math

import jax
import jax.numpy as jnp
from jax.experimental import pallas as pl
from jax.experimental.pallas import tpu as pltpu

EPS = 1e-5  # nn.LayerNorm default


def _layernorm(x, gamma, beta):
    mean = jnp.mean(x, axis=-1, keepdims=True)
    var = jnp.mean((x - mean) ** 2, axis=-1, keepdims=True)
    return (x - mean) * jax.lax.rsqrt(var + EPS) * gamma + beta


def _gelu_exact(x):
    # nn.GELU() default: exact erf formulation (matches PyTorch).
    return 0.5 * x * (1.0 + jax.lax.erf(x * jnp.float32(1.0 / math.sqrt(2.0))))


def encoder_block_kernel(
    x_ref,                       # (N, D)  batch dim squeezed
    ln1_g_ref, ln1_b_ref,        # (1, D) f32
    wqkv_ref, bqkv_ref,          # (D, 3*H*Hd) bf16, (1, 3*H*Hd) f32 (q part pre-scaled)
    wo_ref, bo_ref,              # (H*Hd, D) bf16, (1, D) f32
    ln2_g_ref, ln2_b_ref,        # (1, D) f32
    w1_ref, b1_ref,              # (D, M) bf16, (1, M) f32
    w2_ref, b2_ref,              # (M, D) bf16, (1, D) f32
    o_ref,                       # (N, D)
    oh_scratch,                  # (N, H*Hd) bf16 VMEM scratch (per-head outputs)
    *, num_heads, head_dim,
):
    H, Hd = num_heads, head_dim
    HHd = H * Hd

    x = x_ref[...].astype(jnp.float32)                        # (N, D)

    # ---- LayerNorm 1 (f32 statistics) ----
    xn = _layernorm(x, ln1_g_ref[...], ln1_b_ref[...])
    xn_b = xn.astype(jnp.bfloat16)

    # ---- Fused QKV projection: one MXU contraction (scale folded into q cols) ----
    qkv = jnp.dot(xn_b, wqkv_ref[...], preferred_element_type=jnp.float32)
    qkv = qkv + bqkv_ref[...]                                  # (N, 3*H*Hd) f32
    qkv_b = qkv.astype(jnp.bfloat16)

    # ---- Per-head attention; head outputs written to a shared (N, H*Hd) scratch ----
    # TODO(synk): for long sequences (N >= ~1024) replace the materialized (N, N)
    # score matrix with a K/V-blocked flash-style online softmax (also gives a
    # second parallel grid axis so both v7x TensorCores are busy when B == 1).
    for h in range(H):                                         # static unroll, H small
        qh = qkv_b[:, h * Hd:(h + 1) * Hd]                     # 1/sqrt(Hd) already folded in
        kh = qkv_b[:, HHd + h * Hd: HHd + (h + 1) * Hd]
        vh = qkv_b[:, 2 * HHd + h * Hd: 2 * HHd + (h + 1) * Hd]
        s = jax.lax.dot_general(                               # q @ k^T, f32 acc
            qh, kh, (((1,), (1,)), ((), ())),
            preferred_element_type=jnp.float32)                # (N, N)
        s = s - jnp.max(s, axis=-1, keepdims=True)
        p = jnp.exp(s)
        denom = jnp.sum(p, axis=-1, keepdims=True)             # (N, 1)
        # Un-normalized PV matmul; rescale the small (N, Hd) result instead of
        # the (N, N) probabilities.  Exact divide: negligible cost, tighter parity.
        oh = jnp.dot(p.astype(jnp.bfloat16), vh,
                     preferred_element_type=jnp.float32)       # (N, Hd)
        oh = oh / denom
        oh_scratch[:, h * Hd:(h + 1) * Hd] = oh.astype(jnp.bfloat16)

    # ---- Single wide output projection: (N, H*Hd) @ (H*Hd, D) ----
    attn = jnp.dot(oh_scratch[...], wo_ref[...],
                   preferred_element_type=jnp.float32)         # (N, D)
    y1 = x + attn + bo_ref[...]                                # residual 1

    # ---- LayerNorm 2 + MLP (full-width; see TODO for ViT-L/H chunking) ----
    # TODO(synk): for ViT-L/H on v7x (64 MiB VMEM) add a real grid axis over
    # mlp_dim chunks with w1/w2 BlockSpecs indexed by it (pl.when init/finalize),
    # so only one weight chunk is resident and its DMA pipelines under the matmul.
    yn = _layernorm(y1, ln2_g_ref[...], ln2_b_ref[...]).astype(jnp.bfloat16)
    h1 = jnp.dot(yn, w1_ref[...], preferred_element_type=jnp.float32)
    h1 = _gelu_exact(h1 + b1_ref[...])
    mlp = jnp.dot(h1.astype(jnp.bfloat16), w2_ref[...],
                  preferred_element_type=jnp.float32)

    o_ref[...] = (y1 + mlp + b2_ref[...]).astype(o_ref.dtype)  # residual 2


def pack_params(params, *, num_heads, head_dim, matmul_dtype=jnp.bfloat16):
    """One-time (init-time) weight packing: QKV fusion, 1/sqrt(Hd) fold, bf16 casts.

    Hoisted out of the per-call path so the packed arrays live in HBM once and
    are not re-materialized by XLA on every forward call.
    """
    inv_scale = jnp.float32(1.0 / (head_dim ** 0.5))
    f32 = jnp.float32
    return {
        "ln1_g": params["ln1_g"].astype(f32).reshape(1, -1),
        "ln1_b": params["ln1_b"].astype(f32).reshape(1, -1),
        # Fused (D, 3*H*Hd) weight; scale folded into the q third (weight AND bias).
        "wqkv": jnp.concatenate(
            [params["wq"] * inv_scale, params["wk"], params["wv"]], axis=1
        ).astype(matmul_dtype),
        "bqkv": jnp.concatenate(
            [params["bq"] * inv_scale, params["bk"], params["bv"]], axis=1
        ).astype(f32).reshape(1, -1),
        "wo": params["wo"].astype(matmul_dtype),               # (H*Hd, D)
        "bo": params["bo"].astype(f32).reshape(1, -1),
        "ln2_g": params["ln2_g"].astype(f32).reshape(1, -1),
        "ln2_b": params["ln2_b"].astype(f32).reshape(1, -1),
        "w1": params["w1"].astype(matmul_dtype),
        "b1": params["b1"].astype(f32).reshape(1, -1),
        "w2": params["w2"].astype(matmul_dtype),
        "b2": params["b2"].astype(f32).reshape(1, -1),
    }


def encoder_block(x, packed, *, num_heads, head_dim, donate_x=False):
    """Run the encoder block. `packed` must come from pack_params()."""
    B, N, D = x.shape
    HHd = num_heads * head_dim
    mlp_dim = packed["w1"].shape[1]

    kernel = functools.partial(
        encoder_block_kernel, num_heads=num_heads, head_dim=head_dim)

    operands = (
        x,
        packed["ln1_g"], packed["ln1_b"],
        packed["wqkv"], packed["bqkv"],
        packed["wo"], packed["bo"],
        packed["ln2_g"], packed["ln2_b"],
        packed["w1"], packed["b1"],
        packed["w2"], packed["b2"],
    )

    # Grid-invariant weights/biases: whole-array resident in VMEM, single copy,
    # never re-DMA'd across batch steps (no double buffering).
    weight_spec = pl.BlockSpec(memory_space=pltpu.MemorySpace.VMEM)
    in_specs = [
        pl.BlockSpec((None, N, D), lambda b: (b, 0, 0)),       # x: pipelined over batch
    ] + [weight_spec] * (len(operands) - 1)

    # ---- Per-generation VMEM limit from the real footprint ----
    weight_bytes = sum(int(a.size) * a.dtype.itemsize for a in operands[1:])
    io_block_bytes = 4 * N * D * x.dtype.itemsize             # double-buffered x + out blocks
    interm_bytes = (
        N * (3 * HHd) * 6                                      # qkv f32 + bf16 copies
        + N * N * 8                                            # per-head scores / exp (f32)
        + N * mlp_dim * 6                                      # MLP hidden f32 + bf16
        + N * HHd * 2                                          # per-head output scratch (bf16)
        + 6 * N * D * 4                                        # x/y1/attn/mlp f32 temporaries
    )
    footprint = weight_bytes + io_block_bytes + interm_bytes + (8 << 20)
    try:
        vmem_cap = int(pltpu.get_tpu_info().vmem_capacity_bytes)
    except Exception:  # pragma: no cover - conservative fallback (v7x-sized)
        vmem_cap = 64 << 20
    vmem_limit = int(min(max(footprint, 32 << 20), vmem_cap - (8 << 20)))

    # ---- Advisory cost estimate ----
    flops = 2 * B * N * (
        D * 3 * HHd                       # fused QKV projection
        + 2 * num_heads * N * head_dim    # scores + PV
        + HHd * D                         # output projection
        + 2 * D * mlp_dim                 # MLP fc1 + fc2
    )
    transcendentals = B * (num_heads * N * N + N * mlp_dim)
    bytes_accessed = sum(int(a.size) * a.dtype.itemsize for a in operands)
    bytes_accessed += int(x.size) * x.dtype.itemsize           # output writeback

    return pl.pallas_call(
        kernel,
        out_shape=jax.ShapeDtypeStruct((B, N, D), x.dtype),
        grid_spec=pltpu.PrefetchScalarGridSpec(
            num_scalar_prefetch=0,
            grid=(B,),
            in_specs=in_specs,
            out_specs=pl.BlockSpec((None, N, D), lambda b: (b, 0, 0)),
            scratch_shapes=[pltpu.VMEM((N, HHd), jnp.bfloat16)],
        ),
        compiler_params=pltpu.CompilerParams(
            dimension_semantics=("parallel",),
            vmem_limit_bytes=vmem_limit,
        ),
        cost_estimate=pl.CostEstimate(
            flops=int(flops),
            transcendentals=int(transcendentals),
            bytes_accessed=int(bytes_accessed),
        ),
        # Optional: reuse x's HBM buffer for the output when the caller does not
        # need x afterwards (stacked encoder layers).
        input_output_aliases={0: 0} if donate_x else {},
    )(*operands)


def reference_encoder_block(x, params, *, num_heads, head_dim):
    """Pure-JAX f32 reference mirroring the PyTorch forward (dropout = identity)."""
    B, N, D = x.shape

    def ln(z, g, b):
        m = jnp.mean(z, axis=-1, keepdims=True)
        v = jnp.mean((z - m) ** 2, axis=-1, keepdims=True)
        return (z - m) / jnp.sqrt(v + EPS) * g + b

    xn = ln(x, params["ln1_g"], params["ln1_b"])
    q = xn @ params["wq"] + params["bq"]
    k = xn @ params["wk"] + params["bk"]
    v = xn @ params["wv"] + params["bv"]
    q = q.reshape(B, N, num_heads, head_dim).transpose(0, 2, 1, 3)
    k = k.reshape(B, N, num_heads, head_dim).transpose(0, 2, 1, 3)
    v = v.reshape(B, N, num_heads, head_dim).transpose(0, 2, 1, 3)
    s = jnp.einsum("bhqd,bhkd->bhqk", q, k) / (head_dim ** 0.5)
    p = jax.nn.softmax(s, axis=-1)
    o = jnp.einsum("bhqk,bhkd->bhqd", p, v).transpose(0, 2, 1, 3).reshape(B, N, -1)
    attn_out = o @ params["wo"] + params["bo"]
    y1 = x + attn_out
    yn = ln(y1, params["ln2_g"], params["ln2_b"])
    h1 = yn @ params["w1"] + params["b1"]
    h1 = 0.5 * h1 * (1.0 + jax.lax.erf(h1 / jnp.sqrt(2.0)))
    mlp_out = h1 @ params["w2"] + params["b2"]
    return y1 + mlp_out


if __name__ == "__main__":
    # Small shapes consistent with the module:
    B, N = 2, 8          # batch, sequence length
    D = 32               # in_dim
    num_heads = 4
    head_dim = D // num_heads
    mlp_dim = 64

    key = jax.random.PRNGKey(0)
    ks = jax.random.split(key, 10)

    params = {
        "ln1_g": jnp.ones((1, D), jnp.float32),
        "ln1_b": jnp.zeros((1, D), jnp.float32),
        # LinearGeneral weights are torch.randn-shaped (D, H, Hd) -> flattened (D, H*Hd)
        "wq": 0.1 * jax.random.normal(ks[0], (D, num_heads * head_dim), jnp.float32),
        "bq": jnp.zeros((1, num_heads * head_dim), jnp.float32),
        "wk": 0.1 * jax.random.normal(ks[1], (D, num_heads * head_dim), jnp.float32),
        "bk": jnp.zeros((1, num_heads * head_dim), jnp.float32),
        "wv": 0.1 * jax.random.normal(ks[2], (D, num_heads * head_dim), jnp.float32),
        "bv": jnp.zeros((1, num_heads * head_dim), jnp.float32),
        "wo": 0.1 * jax.random.normal(ks[3], (num_heads * head_dim, D), jnp.float32),
        "bo": jnp.zeros((1, D), jnp.float32),
        "ln2_g": jnp.ones((1, D), jnp.float32),
        "ln2_b": jnp.zeros((1, D), jnp.float32),
        "w1": 0.1 * jax.random.normal(ks[4], (D, mlp_dim), jnp.float32),
        "b1": 0.01 * jax.random.normal(ks[5], (1, mlp_dim), jnp.float32),
        "w2": 0.1 * jax.random.normal(ks[6], (mlp_dim, D), jnp.float32),
        "b2": 0.01 * jax.random.normal(ks[7], (1, D), jnp.float32),
    }

    x = jax.random.normal(ks[8], (B, N, D), jnp.float32)

    # One-time packing (init-time), then the forward call.
    packed = pack_params(params, num_heads=num_heads, head_dim=head_dim)
    packed = jax.tree_util.tree_map(jax.block_until_ready, packed)

    out = encoder_block(x, packed, num_heads=num_heads, head_dim=head_dim)
    out = jax.block_until_ready(out)

    ref = reference_encoder_block(x, params, num_heads=num_heads, head_dim=head_dim)
    assert out.shape == (B, N, D)
    max_err = float(jnp.max(jnp.abs(out - ref)))
    # bf16 matmul operands (f32 accumulation) => relaxed tolerance vs f32 reference.
    assert jnp.allclose(out, ref, rtol=3e-2, atol=3e-2), f"max abs err {max_err}"

    # TODO(synk): dropout layers are omitted (inference/eval semantics — identity).
    print("KERNEL_OK")
</pallas_src>

<mosaic_0001>
module attributes {stable_mosaic.version = 11 : i64} {
  func.func @encoder_block_kernel(%arg0: i32, %arg1: memref<1x8x32xf32, #tpu.memory_space<vmem>>, %arg2: memref<1x32xf32, #tpu.memory_space<vmem>>, %arg3: memref<1x32xf32, #tpu.memory_space<vmem>>, %arg4: memref<32x96xbf16, #tpu.memory_space<vmem>>, %arg5: memref<1x96xf32, #tpu.memory_space<vmem>>, %arg6: memref<32x32xbf16, #tpu.memory_space<vmem>>, %arg7: memref<1x32xf32, #tpu.memory_space<vmem>>, %arg8: memref<1x32xf32, #tpu.memory_space<vmem>>, %arg9: memref<1x32xf32, #tpu.memory_space<vmem>>, %arg10: memref<32x64xbf16, #tpu.memory_space<vmem>>, %arg11: memref<1x64xf32, #tpu.memory_space<vmem>>, %arg12: memref<64x32xbf16, #tpu.memory_space<vmem>>, %arg13: memref<1x32xf32, #tpu.memory_space<vmem>>, %arg14: memref<1x8x32xf32, #tpu.memory_space<vmem>>, %arg15: memref<8x32xbf16, #tpu.memory_space<vmem>>) attributes {dimension_semantics = [#tpu.dimension_semantics<parallel>], iteration_bounds = array<i64: 2>, scalar_prefetch = 0 : i64, scratch_operands = 1 : i64, tpu.core_type = #tpu.core_type<tc>, window_params = [{transform_indices = @transform_0, window_bounds = array<i64: 1, 8, 32>}, {pipeline_mode = #tpu.pipeline_mode<synchronous>, transform_indices = @transform_1, window_bounds = array<i64: 1, 32>}, {pipeline_mode = #tpu.pipeline_mode<synchronous>, transform_indices = @transform_2, window_bounds = array<i64: 1, 32>}, {pipeline_mode = #tpu.pipeline_mode<synchronous>, transform_indices = @transform_3, window_bounds = array<i64: 32, 96>}, {pipeline_mode = #tpu.pipeline_mode<synchronous>, transform_indices = @transform_4, window_bounds = array<i64: 1, 96>}, {pipeline_mode = #tpu.pipeline_mode<synchronous>, transform_indices = @transform_5, window_bounds = array<i64: 32, 32>}, {pipeline_mode = #tpu.pipeline_mode<synchronous>, transform_indices = @transform_6, window_bounds = array<i64: 1, 32>}, {pipeline_mode = #tpu.pipeline_mode<synchronous>, transform_indices = @transform_7, window_bounds = array<i64: 1, 32>}, {pipeline_mode = #tpu.pipeline_mode<synchronous>, transform_indices = @transform_8, window_bounds = array<i64: 1, 32>}, {pipeline_mode = #tpu.pipeline_mode<synchronous>, transform_indices = @transform_9, window_bounds = array<i64: 32, 64>}, {pipeline_mode = #tpu.pipeline_mode<synchronous>, transform_indices = @transform_10, window_bounds = array<i64: 1, 64>}, {pipeline_mode = #tpu.pipeline_mode<synchronous>, transform_indices = @transform_11, window_bounds = array<i64: 64, 32>}, {pipeline_mode = #tpu.pipeline_mode<synchronous>, transform_indices = @transform_12, window_bounds = array<i64: 1, 32>}, {transform_indices = @transform_13, window_bounds = array<i64: 1, 8, 32>}]} {
    %c0 = arith.constant 0 : index
    %c0_0 = arith.constant 0 : index
    %c0_1 = arith.constant 0 : index
    %0 = vector.load %arg1[%c0, %c0_0, %c0_1] : memref<1x8x32xf32, #tpu.memory_space<vmem>>, vector<1x8x32xf32>
    %1 = vector.shape_cast %0 : vector<1x8x32xf32> to vector<8x32xf32>
    %c0_2 = arith.constant 0 : index
    %c0_3 = arith.constant 0 : index
    %2 = vector.load %arg2[%c0_2, %c0_3] : memref<1x32xf32, #tpu.memory_space<vmem>>, vector<1x32xf32>
    %c0_4 = arith.constant 0 : index
    %c0_5 = arith.constant 0 : index
    %3 = vector.load %arg3[%c0_4, %c0_5] : memref<1x32xf32, #tpu.memory_space<vmem>>, vector<1x32xf32>
    %cst = arith.constant dense<0.000000e+00> : vector<8xf32>
    %4 = vector.multi_reduction <add>, %1, %cst [1] : vector<8x32xf32> to vector<8xf32>
    %5 = vector.shape_cast %4 : vector<8xf32> to vector<8x1xf32>
    %cst_6 = arith.constant 3.200000e+01 : f32
    %6 = vector.broadcast %cst_6 : f32 to vector<8x1xf32>
    %7 = arith.divf %5, %6 : vector<8x1xf32>
    %8 = vector.broadcast %7 : vector<8x1xf32> to vector<8x32xf32>
    %9 = arith.subf %1, %8 : vector<8x32xf32>
    %10 = arith.mulf %9, %9 : vector<8x32xf32>
    %cst_7 = arith.constant dense<0.000000e+00> : vector<8xf32>
    %11 = vector.multi_reduction <add>, %10, %cst_7 [1] : vector<8x32xf32> to vector<8xf32>
    %12 = vector.shape_cast %11 : vector<8xf32> to vector<8x1xf32>
    %cst_8 = arith.constant 3.200000e+01 : f32
    %13 = vector.broadcast %cst_8 : f32 to vector<8x1xf32>
    %14 = arith.divf %12, %13 : vector<8x1xf32>
    %15 = vector.broadcast %7 : vector<8x1xf32> to vector<8x32xf32>
    %16 = arith.subf %1, %15 : vector<8x32xf32>
    %cst_9 = arith.constant 9.99999974E-6 : f32
    %17 = vector.broadcast %cst_9 : f32 to vector<8x1xf32>
    %18 = arith.addf %14, %17 : vector<8x1xf32>
    %19 = math.rsqrt %18 : vector<8x1xf32>
    %20 = vector.broadcast %19 : vector<8x1xf32> to vector<8x32xf32>
    %21 = arith.mulf %16, %20 : vector<8x32xf32>
    %22 = vector.broadcast %2 : vector<1x32xf32> to vector<8x32xf32>
    %23 = arith.mulf %21, %22 : vector<8x32xf32>
    %24 = vector.broadcast %3 : vector<1x32xf32> to vector<8x32xf32>
    %25 = arith.addf %23, %24 : vector<8x32xf32>
    %26 = arith.truncf %25 : vector<8x32xf32> to vector<8x32xbf16>
    %c0_10 = arith.constant 0 : index
    %c0_11 = arith.constant 0 : index
    %27 = vector.load %arg4[%c0_10, %c0_11] : memref<32x96xbf16, #tpu.memory_space<vmem>>, vector<32x96xbf16>
    %cst_12 = arith.constant dense<0.000000e+00> : vector<8x96xf32>
    %28 = tpu.matmul %26, %27, %cst_12 {dimension_numbers = #tpu.dot_dimension_numbers<[1], [0], [0], [1], [0, 0, 1, 1], [], []>} : vector<8x32xbf16>, vector<32x96xbf16>, vector<8x96xf32> -> vector<8x96xf32>
    %c0_13 = arith.constant 0 : index
    %c0_14 = arith.constant 0 : index
    %29 = vector.load %arg5[%c0_13, %c0_14] : memref<1x96xf32, #tpu.memory_space<vmem>>, vector<1x96xf32>
    %30 = vector.broadcast %29 : vector<1x96xf32> to vector<8x96xf32>
    %31 = arith.addf %28, %30 : vector<8x96xf32>
    %32 = arith.truncf %31 : vector<8x96xf32> to vector<8x96xbf16>
    %33 = vector.extract_strided_slice %32 {offsets = [0, 0], sizes = [8, 8], strides = [1, 1]} : vector<8x96xbf16> to vector<8x8xbf16>
    %34 = vector.extract_strided_slice %32 {offsets = [0, 32], sizes = [8, 8], strides = [1, 1]} : vector<8x96xbf16> to vector<8x8xbf16>
    %35 = vector.extract_strided_slice %32 {offsets = [0, 64], sizes = [8, 8], strides = [1, 1]} : vector<8x96xbf16> to vector<8x8xbf16>
    %cst_15 = arith.constant dense<0.000000e+00> : vector<8x8xf32>
    %36 = tpu.matmul %33, %34, %cst_15 {dimension_numbers = #tpu.dot_dimension_numbers<[1], [1], [0], [0], [0, 0, 1, 0], [], []>} : vector<8x8xbf16>, vector<8x8xbf16>, vector<8x8xf32> -> vector<8x8xf32>
    %cst_16 = arith.constant dense<0xFF800000> : vector<8xf32>
    %37 = vector.multi_reduction <maximumf>, %36, %cst_16 [1] : vector<8x8xf32> to vector<8xf32>
    %38 = vector.shape_cast %37 : vector<8xf32> to vector<8x1xf32>
    %39 = vector.broadcast %38 : vector<8x1xf32> to vector<8x8xf32>
    %40 = arith.subf %36, %39 : vector<8x8xf32>
    %41 = math.exp %40 : vector<8x8xf32>
    %cst_17 = arith.constant dense<0.000000e+00> : vector<8xf32>
    %42 = vector.multi_reduction <add>, %41, %cst_17 [1] : vector<8x8xf32> to vector<8xf32>
    %43 = vector.shape_cast %42 : vector<8xf32> to vector<8x1xf32>
    %44 = arith.truncf %41 : vector<8x8xf32> to vector<8x8xbf16>
    %cst_18 = arith.constant dense<0.000000e+00> : vector<8x8xf32>
    %45 = tpu.matmul %44, %35, %cst_18 {dimension_numbers = #tpu.dot_dimension_numbers<[1], [0], [0], [1], [0, 0, 1, 1], [], []>} : vector<8x8xbf16>, vector<8x8xbf16>, vector<8x8xf32> -> vector<8x8xf32>
    %46 = vector.broadcast %43 : vector<8x1xf32> to vector<8x8xf32>
    %47 = arith.divf %45, %46 : vector<8x8xf32>
    %48 = arith.truncf %47 : vector<8x8xf32> to vector<8x8xbf16>
    %c0_19 = arith.constant 0 : index
    %c0_20 = arith.constant 0 : index
    %49 = vector.load %arg15[%c0_19, %c0_20] : memref<8x32xbf16, #tpu.memory_space<vmem>>, vector<8x8xbf16>
    tpu.vector_store %arg15[%c0_19, %c0_20], %48 {strides = array<i32>} : memref<8x32xbf16, #tpu.memory_space<vmem>>, vector<8x8xbf16>,
    %50 = vector.extract_strided_slice %32 {offsets = [0, 8], sizes = [8, 8], strides = [1, 1]} : vector<8x96xbf16> to vector<8x8xbf16>
    %51 = vector.extract_strided_slice %32 {offsets = [0, 40], sizes = [8, 8], strides = [1, 1]} : vector<8x96xbf16> to vector<8x8xbf16>
    %52 = vector.extract_strided_slice %32 {offsets = [0, 72], sizes = [8, 8], strides = [1, 1]} : vector<8x96xbf16> to vector<8x8xbf16>
    %cst_21 = arith.constant dense<0.000000e+00> : vector<8x8xf32>
    %53 = tpu.matmul %50, %51, %cst_21 {dimension_numbers = #tpu.dot_dimension_numbers<[1], [1], [0], [0], [0, 0, 1, 0], [], []>} : vector<8x8xbf16>, vector<8x8xbf16>, vector<8x8xf32> -> vector<8x8xf32>
    %cst_22 = arith.constant dense<0xFF800000> : vector<8xf32>
    %54 = vector.multi_reduction <maximumf>, %53, %cst_22 [1] : vector<8x8xf32> to vector<8xf32>
    %55 = vector.shape_cast %54 : vector<8xf32> to vector<8x1xf32>
    %56 = vector.broadcast %55 : vector<8x1xf32> to vector<8x8xf32>
    %57 = arith.subf %53, %56 : vector<8x8xf32>
    %58 = math.exp %57 : vector<8x8xf32>
    %cst_23 = arith.constant dense<0.000000e+00> : vector<8xf32>
    %59 = vector.multi_reduction <add>, %58, %cst_23 [1] : vector<8x8xf32> to vector<8xf32>
    %60 = vector.shape_cast %59 : vector<8xf32> to vector<8x1xf32>
    %61 = arith.truncf %58 : vector<8x8xf32> to vector<8x8xbf16>
    %cst_24 = arith.constant dense<0.000000e+00> : vector<8x8xf32>
    %62 = tpu.matmul %61, %52, %cst_24 {dimension_numbers = #tpu.dot_dimension_numbers<[1], [0], [0], [1], [0, 0, 1, 1], [], []>} : vector<8x8xbf16>, vector<8x8xbf16>, vector<8x8xf32> -> vector<8x8xf32>
    %63 = vector.broadcast %60 : vector<8x1xf32> to vector<8x8xf32>
    %64 = arith.divf %62, %63 : vector<8x8xf32>
    %65 = arith.truncf %64 : vector<8x8xf32> to vector<8x8xbf16>
    %c0_25 = arith.constant 0 : index
    %c8 = arith.constant 8 : index
    %66 = vector.load %arg15[%c0_25, %c8] : memref<8x32xbf16, #tpu.memory_space<vmem>>, vector<8x8xbf16>
    tpu.vector_store %arg15[%c0_25, %c8], %65 {strides = array<i32>} : memref<8x32xbf16, #tpu.memory_space<vmem>>, vector<8x8xbf16>,
    %67 = vector.extract_strided_slice %32 {offsets = [0, 16], sizes = [8, 8], strides = [1, 1]} : vector<8x96xbf16> to vector<8x8xbf16>
    %68 = vector.extract_strided_slice %32 {offsets = [0, 48], sizes = [8, 8], strides = [1, 1]} : vector<8x96xbf16> to vector<8x8xbf16>
    %69 = vector.extract_strided_slice %32 {offsets = [0, 80], sizes = [8, 8], strides = [1, 1]} : vector<8x96xbf16> to vector<8x8xbf16>
    %cst_26 = arith.constant dense<0.000000e+00> : vector<8x8xf32>
    %70 = tpu.matmul %67, %68, %cst_26 {dimension_numbers = #tpu.dot_dimension_numbers<[1], [1], [0], [0], [0, 0, 1, 0], [], []>} : vector<8x8xbf16>, vector<8x8xbf16>, vector<8x8xf32> -> vector<8x8xf32>
    %cst_27 = arith.constant dense<0xFF800000> : vector<8xf32>
    %71 = vector.multi_reduction <maximumf>, %70, %cst_27 [1] : vector<8x8xf32> to vector<8xf32>
    %72 = vector.shape_cast %71 : vector<8xf32> to vector<8x1xf32>
    %73 = vector.broadcast %72 : vector<8x1xf32> to vector<8x8xf32>
    %74 = arith.subf %70, %73 : vector<8x8xf32>
    %75 = math.exp %74 : vector<8x8xf32>
    %cst_28 = arith.constant dense<0.000000e+00> : vector<8xf32>
    %76 = vector.multi_reduction <add>, %75, %cst_28 [1] : vector<8x8xf32> to vector<8xf32>
    %77 = vector.shape_cast %76 : vector<8xf32> to vector<8x1xf32>
    %78 = arith.truncf %75 : vector<8x8xf32> to vector<8x8xbf16>
    %cst_29 = arith.constant dense<0.000000e+00> : vector<8x8xf32>
    %79 = tpu.matmul %78, %69, %cst_29 {dimension_numbers = #tpu.dot_dimension_numbers<[1], [0], [0], [1], [0, 0, 1, 1], [], []>} : vector<8x8xbf16>, vector<8x8xbf16>, vector<8x8xf32> -> vector<8x8xf32>
    %80 = vector.broadcast %77 : vector<8x1xf32> to vector<8x8xf32>
    %81 = arith.divf %79, %80 : vector<8x8xf32>
    %82 = arith.truncf %81 : vector<8x8xf32> to vector<8x8xbf16>
    %c0_30 = arith.constant 0 : index
    %c16 = arith.constant 16 : index
    %83 = vector.load %arg15[%c0_30, %c16] : memref<8x32xbf16, #tpu.memory_space<vmem>>, vector<8x8xbf16>
    tpu.vector_store %arg15[%c0_30, %c16], %82 {strides = array<i32>} : memref<8x32xbf16, #tpu.memory_space<vmem>>, vector<8x8xbf16>,
    %84 = vector.extract_strided_slice %32 {offsets = [0, 24], sizes = [8, 8], strides = [1, 1]} : vector<8x96xbf16> to vector<8x8xbf16>
    %85 = vector.extract_strided_slice %32 {offsets = [0, 56], sizes = [8, 8], strides = [1, 1]} : vector<8x96xbf16> to vector<8x8xbf16>
    %86 = vector.extract_strided_slice %32 {offsets = [0, 88], sizes = [8, 8], strides = [1, 1]} : vector<8x96xbf16> to vector<8x8xbf16>
    %cst_31 = arith.constant dense<0.000000e+00> : vector<8x8xf32>
    %87 = tpu.matmul %84, %85, %cst_31 {dimension_numbers = #tpu.dot_dimension_numbers<[1], [1], [0], [0], [0, 0, 1, 0], [], []>} : vector<8x8xbf16>, vector<8x8xbf16>, vector<8x8xf32> -> vector<8x8xf32>
    %cst_32 = arith.constant dense<0xFF800000> : vector<8xf32>
    %88 = vector.multi_reduction <maximumf>, %87, %cst_32 [1] : vector<8x8xf32> to vector<8xf32>
    %89 = vector.shape_cast %88 : vector<8xf32> to vector<8x1xf32>
    %90 = vector.broadcast %89 : vector<8x1xf32> to vector<8x8xf32>
    %91 = arith.subf %87, %90 : vector<8x8xf32>
    %92 = math.exp %91 : vector<8x8xf32>
    %cst_33 = arith.constant dense<0.000000e+00> : vector<8xf32>
    %93 = vector.multi_reduction <add>, %92, %cst_33 [1] : vector<8x8xf32> to vector<8xf32>
    %94 = vector.shape_cast %93 : vector<8xf32> to vector<8x1xf32>
    %95 = arith.truncf %92 : vector<8x8xf32> to vector<8x8xbf16>
    %cst_34 = arith.constant dense<0.000000e+00> : vector<8x8xf32>
    %96 = tpu.matmul %95, %86, %cst_34 {dimension_numbers = #tpu.dot_dimension_numbers<[1], [0], [0], [1], [0, 0, 1, 1], [], []>} : vector<8x8xbf16>, vector<8x8xbf16>, vector<8x8xf32> -> vector<8x8xf32>
    %97 = vector.broadcast %94 : vector<8x1xf32> to vector<8x8xf32>
    %98 = arith.divf %96, %97 : vector<8x8xf32>
    %99 = arith.truncf %98 : vector<8x8xf32> to vector<8x8xbf16>
    %c0_35 = arith.constant 0 : index
    %c24 = arith.constant 24 : index
    %100 = vector.load %arg15[%c0_35, %c24] : memref<8x32xbf16, #tpu.memory_space<vmem>>, vector<8x8xbf16>
    tpu.vector_store %arg15[%c0_35, %c24], %99 {strides = array<i32>} : memref<8x32xbf16, #tpu.memory_space<vmem>>, vector<8x8xbf16>,
    %c0_36 = arith.constant 0 : index
    %c0_37 = arith.constant 0 : index
    %101 = vector.load %arg15[%c0_36, %c0_37] : memref<8x32xbf16, #tpu.memory_space<vmem>>, vector<8x32xbf16>
    %c0_38 = arith.constant 0 : index
    %c0_39 = arith.constant 0 : index
    %102 = vector.load %arg6[%c0_38, %c0_39] : memref<32x32xbf16, #tpu.memory_space<vmem>>, vector<32x32xbf16>
    %cst_40 = arith.constant dense<0.000000e+00> : vector<8x32xf32>
    %103 = tpu.matmul %101, %102, %cst_40 {dimension_numbers = #tpu.dot_dimension_numbers<[1], [0], [0], [1], [0, 0, 1, 1], [], []>} : vector<8x32xbf16>, vector<32x32xbf16>, vector<8x32xf32> -> vector<8x32xf32>
    %104 = arith.addf %1, %103 : vector<8x32xf32>
    %c0_41 = arith.constant 0 : index
    %c0_42 = arith.constant 0 : index
    %105 = vector.load %arg7[%c0_41, %c0_42] : memref<1x32xf32, #tpu.memory_space<vmem>>, vector<1x32xf32>
    %106 = vector.broadcast %105 : vector<1x32xf32> to vector<8x32xf32>
    %107 = arith.addf %104, %106 : vector<8x32xf32>
    %c0_43 = arith.constant 0 : index
    %c0_44 = arith.constant 0 : index
    %108 = vector.load %arg8[%c0_43, %c0_44] : memref<1x32xf32, #tpu.memory_space<vmem>>, vector<1x32xf32>
    %c0_45 = arith.constant 0 : index
    %c0_46 = arith.constant 0 : index
    %109 = vector.load %arg9[%c0_45, %c0_46] : memref<1x32xf32, #tpu.memory_space<vmem>>, vector<1x32xf32>
    %cst_47 = arith.constant dense<0.000000e+00> : vector<8xf32>
    %110 = vector.multi_reduction <add>, %107, %cst_47 [1] : vector<8x32xf32> to vector<8xf32>
    %111 = vector.shape_cast %110 : vector<8xf32> to vector<8x1xf32>
    %cst_48 = arith.constant 3.200000e+01 : f32
    %112 = vector.broadcast %cst_48 : f32 to vector<8x1xf32>
    %113 = arith.divf %111, %112 : vector<8x1xf32>
    %114 = vector.broadcast %113 : vector<8x1xf32> to vector<8x32xf32>
    %115 = arith.subf %107, %114 : vector<8x32xf32>
    %116 = arith.mulf %115, %115 : vector<8x32xf32>
    %cst_49 = arith.constant dense<0.000000e+00> : vector<8xf32>
    %117 = vector.multi_reduction <add>, %116, %cst_49 [1] : vector<8x32xf32> to vector<8xf32>
    %118 = vector.shape_cast %117 : vector<8xf32> to vector<8x1xf32>
    %cst_50 = arith.constant 3.200000e+01 : f32
    %119 = vector.broadcast %cst_50 : f32 to vector<8x1xf32>
    %120 = arith.divf %118, %119 : vector<8x1xf32>
    %121 = vector.broadcast %113 : vector<8x1xf32> to vector<8x32xf32>
    %122 = arith.subf %107, %121 : vector<8x32xf32>
    %cst_51 = arith.constant 9.99999974E-6 : f32
    %123 = vector.broadcast %cst_51 : f32 to vector<8x1xf32>
    %124 = arith.addf %120, %123 : vector<8x1xf32>
    %125 = math.rsqrt %124 : vector<8x1xf32>
    %126 = vector.broadcast %125 : vector<8x1xf32> to vector<8x32xf32>
    %127 = arith.mulf %122, %126 : vector<8x32xf32>
    %128 = vector.broadcast %108 : vector<1x32xf32> to vector<8x32xf32>
    %129 = arith.mulf %127, %128 : vector<8x32xf32>
    %130 = vector.broadcast %109 : vector<1x32xf32> to vector<8x32xf32>
    %131 = arith.addf %129, %130 : vector<8x32xf32>
    %132 = arith.truncf %131 : vector<8x32xf32> to vector<8x32xbf16>
    %c0_52 = arith.constant 0 : index
    %c0_53 = arith.constant 0 : index
    %133 = vector.load %arg10[%c0_52, %c0_53] : memref<32x64xbf16, #tpu.memory_space<vmem>>, vector<32x64xbf16>
    %cst_54 = arith.constant dense<0.000000e+00> : vector<8x64xf32>
    %134 = tpu.matmul %132, %133, %cst_54 {dimension_numbers = #tpu.dot_dimension_numbers<[1], [0], [0], [1], [0, 0, 1, 1], [], []>} : vector<8x32xbf16>, vector<32x64xbf16>, vector<8x64xf32> -> vector<8x64xf32>
    %c0_55 = arith.constant 0 : index
    %c0_56 = arith.constant 0 : index
    %135 = vector.load %arg11[%c0_55, %c0_56] : memref<1x64xf32, #tpu.memory_space<vmem>>, vector<1x64xf32>
    %136 = vector.broadcast %135 : vector<1x64xf32> to vector<8x64xf32>
    %137 = arith.addf %134, %136 : vector<8x64xf32>
    %cst_57 = arith.constant 5.000000e-01 : f32
    %138 = vector.broadcast %cst_57 : f32 to vector<8x64xf32>
    %139 = arith.mulf %138, %137 : vector<8x64xf32>
    %cst_58 = arith.constant 0.707106769 : f32
    %140 = vector.broadcast %cst_58 : f32 to vector<8x64xf32>
    %141 = arith.mulf %137, %140 : vector<8x64xf32>
    %142 = math.erf %141 : vector<8x64xf32>
    %cst_59 = arith.constant 1.000000e+00 : f32
    %143 = vector.broadcast %cst_59 : f32 to vector<8x64xf32>
    %144 = arith.addf %143, %142 : vector<8x64xf32>
    %145 = arith.mulf %139, %144 : vector<8x64xf32>
    %146 = arith.truncf %145 : vector<8x64xf32> to vector<8x64xbf16>
    %c0_60 = arith.constant 0 : index
    %c0_61 = arith.constant 0 : index
    %147 = vector.load %arg12[%c0_60, %c0_61] : memref<64x32xbf16, #tpu.memory_space<vmem>>, vector<64x32xbf16>
    %cst_62 = arith.constant dense<0.000000e+00> : vector<8x32xf32>
    %148 = tpu.matmul %146, %147, %cst_62 {dimension_numbers = #tpu.dot_dimension_numbers<[1], [0], [0], [1], [0, 0, 1, 1], [], []>} : vector<8x64xbf16>, vector<64x32xbf16>, vector<8x32xf32> -> vector<8x32xf32>
    %149 = arith.addf %107, %148 : vector<8x32xf32>
    %c0_63 = arith.constant 0 : index
    %c0_64 = arith.constant 0 : index
    %150 = vector.load %arg13[%c0_63, %c0_64] : memref<1x32xf32, #tpu.memory_space<vmem>>, vector<1x32xf32>
    %151 = vector.broadcast %150 : vector<1x32xf32> to vector<8x32xf32>
    %152 = arith.addf %149, %151 : vector<8x32xf32>
    %c0_65 = arith.constant 0 : index
    %c0_66 = arith.constant 0 : index
    %c0_67 = arith.constant 0 : index
    %153 = vector.load %arg14[%c0_65, %c0_66, %c0_67] : memref<1x8x32xf32, #tpu.memory_space<vmem>>, vector<1x8x32xf32>
    %154 = vector.shape_cast %153 : vector<1x8x32xf32> to vector<8x32xf32>
    %155 = vector.shape_cast %152 : vector<8x32xf32> to vector<1x8x32xf32>
    tpu.vector_store %arg14[%c0_65, %c0_66, %c0_67], %155 {strides = array<i32>} : memref<1x8x32xf32, #tpu.memory_space<vmem>>, vector<1x8x32xf32>,
    return
  }
  func.func @transform_0(%arg0: i32) -> (i32, i32, i32) {
    %c0_i32 = arith.constant 0 : i32
    %c0_i32_0 = arith.constant 0 : i32
    %c0_i32_1 = arith.constant 0 : i32
    return %arg0, %c0_i32, %c0_i32_0 : i32, i32, i32
  }
  func.func @transform_1(%arg0: i32) -> (i32, i32) {
    %c0_i32 = arith.constant 0 : i32
    %c0_i32_0 = arith.constant 0 : i32
    %c0_i32_1 = arith.constant 0 : i32
    return %c0_i32, %c0_i32_0 : i32, i32
  }
  func.func @transform_2(%arg0: i32) -> (i32, i32) {
    %c0_i32 = arith.constant 0 : i32
    %c0_i32_0 = arith.constant 0 : i32
    %c0_i32_1 = arith.constant 0 : i32
    return %c0_i32, %c0_i32_0 : i32, i32
  }
  func.func @transform_3(%arg0: i32) -> (i32, i32) {
    %c0_i32 = arith.constant 0 : i32
    %c0_i32_0 = arith.constant 0 : i32
    %c0_i32_1 = arith.constant 0 : i32
    return %c0_i32, %c0_i32_0 : i32, i32
  }
  func.func @transform_4(%arg0: i32) -> (i32, i32) {
    %c0_i32 = arith.constant 0 : i32
    %c0_i32_0 = arith.constant 0 : i32
    %c0_i32_1 = arith.constant 0 : i32
    return %c0_i32, %c0_i32_0 : i32, i32
  }
  func.func @transform_5(%arg0: i32) -> (i32, i32) {
    %c0_i32 = arith.constant 0 : i32
    %c0_i32_0 = arith.constant 0 : i32
    %c0_i32_1 = arith.constant 0 : i32
    return %c0_i32, %c0_i32_0 : i32, i32
  }
  func.func @transform_6(%arg0: i32) -> (i32, i32) {
    %c0_i32 = arith.constant 0 : i32
    %c0_i32_0 = arith.constant 0 : i32
    %c0_i32_1 = arith.constant 0 : i32
    return %c0_i32, %c0_i32_0 : i32, i32
  }
  func.func @transform_7(%arg0: i32) -> (i32, i32) {
    %c0_i32 = arith.constant 0 : i32
    %c0_i32_0 = arith.constant 0 : i32
    %c0_i32_1 = arith.constant 0 : i32
    return %c0_i32, %c0_i32_0 : i32, i32
  }
  func.func @transform_8(%arg0: i32) -> (i32, i32) {
    %c0_i32 = arith.constant 0 : i32
    %c0_i32_0 = arith.constant 0 : i32
    %c0_i32_1 = arith.constant 0 : i32
    return %c0_i32, %c0_i32_0 : i32, i32
  }
  func.func @transform_9(%arg0: i32) -> (i32, i32) {
    %c0_i32 = arith.constant 0 : i32
    %c0_i32_0 = arith.constant 0 : i32
    %c0_i32_1 = arith.constant 0 : i32
    return %c0_i32, %c0_i32_0 : i32, i32
  }
  func.func @transform_10(%arg0: i32) -> (i32, i32) {
    %c0_i32 = arith.constant 0 : i32
    %c0_i32_0 = arith.constant 0 : i32
    %c0_i32_1 = arith.constant 0 : i32
    return %c0_i32, %c0_i32_0 : i32, i32
  }
  func.func @transform_11(%arg0: i32) -> (i32, i32) {
    %c0_i32 = arith.constant 0 : i32
    %c0_i32_0 = arith.constant 0 : i32
    %c0_i32_1 = arith.constant 0 : i32
    return %c0_i32, %c0_i32_0 : i32, i32
  }
  func.func @transform_12(%arg0: i32) -> (i32, i32) {
    %c0_i32 = arith.constant 0 : i32
    %c0_i32_0 = arith.constant 0 : i32
    %c0_i32_1 = arith.constant 0 : i32
    return %c0_i32, %c0_i32_0 : i32, i32
  }
  func.func @transform_13(%arg0: i32) -> (i32, i32, i32) {
    %c0_i32 = arith.constant 0 : i32
    %c0_i32_0 = arith.constant 0 : i32
    %c0_i32_1 = arith.constant 0 : i32
    return %arg0, %c0_i32, %c0_i32_0 : i32, i32, i32
  }
}

</mosaic_0001>

<llo_original>
// kernel: tpu_custom_call.1
$region0: #{tpu_custom_call.1}
  #allocation0 [shape = 'u32[]', space=smem, size = 0x4, offset = 0x4, fixed_abs, tag = 'smem constant byte address 0x4 - core index']
  #allocation1 [shape = 'u32[144,128]{1,0:T(1,128)}', space=vmem, size = 0x12000, scoped, tag = 'internal scratch']
  #allocation2 [shape = 'bf16[8,32]{1,0:T(8,128)(2,1)}', space=vmem, size = 0x800, scoped, tag = 'scratch operand']
  %s0 = inlined_call_operand.vmem [shape: f32[2,8,32], index: 0, kind: input, shape index: {}]
  %s1 = inlined_call_operand.vmem [shape: f32[1,32], index: 1, kind: input, shape index: {}]
  %s2 = inlined_call_operand.vmem [shape: f32[1,32], index: 2, kind: input, shape index: {}]
  %s3 = inlined_call_operand.vmem [shape: bf16[32,96], index: 3, kind: input, shape index: {}]
  %s4 = inlined_call_operand.hbm [shape: f32[1,96], index: 4, kind: input, shape index: {}]
  %s5 = inlined_call_operand.vmem [shape: bf16[32,32], index: 5, kind: input, shape index: {}]
  %s6 = inlined_call_operand.hbm [shape: f32[1,32], index: 6, kind: input, shape index: {}]
  %s7 = inlined_call_operand.hbm [shape: f32[1,32], index: 7, kind: input, shape index: {}]
  %s8 = inlined_call_operand.hbm [shape: f32[1,32], index: 8, kind: input, shape index: {}]
  %s9 = inlined_call_operand.vmem [shape: bf16[32,64], index: 9, kind: input, shape index: {}]
  %s10 = inlined_call_operand.vmem [shape: f32[1,64], index: 10, kind: input, shape index: {}]
  %s11 = inlined_call_operand.vmem [shape: bf16[64,32], index: 11, kind: input, shape index: {}]
  %s12 = inlined_call_operand.vmem [shape: f32[1,32], index: 12, kind: input, shape index: {}]
  %s13 = inlined_call_operand.hbm [shape: f32[2,8,32], index: 13, kind: output, shape index: {}]
  %s14 = sld [smem:[#allocation0]]
  $region101: #{tpu_custom_call.1} parent=0
    _
  %s16 = ssub.s32 1, %s14
  %s17 = scalar_select 0, %s16, %s14
  $region1: #{tpu_custom_call.1} parent=0
    #allocation3 [shape = 'u8[512]{0}', space=vmem, size = 0x400, scoped, tag = 'input window, operand 4, single buffered']
    #allocation4 [shape = 's32[2]{0}', space=sflag, size = 0x8, scoped, tag = 'scoped memory for tpu_custom_call.1']
    #allocation5 [shape = 's32[2]{0}', space=sflag, size = 0x8, scoped, tag = 'scoped memory for tpu_custom_call.1']
    #allocation6 [shape = 'u8[512]{0}', space=vmem, size = 0x400, scoped, tag = 'input window, operand 6, single buffered']
    #allocation7 [shape = 's32[1]{0}', space=sflag, size = 0x4, scoped, tag = 'scoped memory for tpu_custom_call.1']
    #allocation8 [shape = 'u8[512]{0}', space=vmem, size = 0x400, scoped, tag = 'input window, operand 7, single buffered']
    #allocation9 [shape = 'u8[512]{0}', space=vmem, size = 0x400, scoped, tag = 'input window, operand 8, single buffered']
    #allocation10 [shape = 's32[1]{0}', space=sflag, size = 0x4, scoped, tag = 'scoped memory for tpu_custom_call.1']
    #allocation11 [shape = 'u8[8192]{0}', space=vmem, size = 0x2000, scoped, tag = 'output window, operand 0']
    %18 = vsyncpa [#allocation4], 0
    %19 = vsyncpa [#allocation7], 0
    %20 = vsyncpa [#allocation10], 0
    %21 = vsyncpa [#allocation5], 0
    %s22 = scalar_lea.sflag [#allocation5], 1
    %23 = vsyncpa %s22, 0
    loop: start=0, step=1, limit=4
    $region2: #{tpu_custom_call.1} parent=1 // loop_pre_header
      _
    $region3: #{tpu_custom_call.1} parent=1 // loop_header
      %s25 = sphi 0, %s29
      %p26 = scmp.ge.s32.totalorder %s25, 4
      %s35 = sphi 0, %s37
      %s38 = sphi 0, %s35
      %s39 = sphi 0, %s38
      %s55 = sphi 0, %s39
      %s59 = sphi 0, %s59
      %s61 = sphi 0, %s59
      %s62 = sphi 0, %s61
      %s76 = sphi 0, %s62
      %s80 = sphi 0, %s80
      %s82 = sphi 0, %s80
      %s83 = sphi 0, %s82
      %s97 = sphi 0, %s83
      %s101 = sphi 0, %s101
      %s103 = sphi 0, %s101
      %s104 = sphi 0, %s103
      %s118 = sphi 0, %s104
      %s122 = sphi 0, %s122
      %s124 = sphi 0, %s122
      %s125 = sphi 0, %s124
      %s139 = sphi 0, %s125
      %s143 = sphi 0, %s143
      %s145 = sphi 0, %s143
      %s146 = sphi 0, %s145
      %s160 = sphi 0, %s146
      %s164 = sphi 0, %s164
      %s166 = sphi 0, %s164
      %s167 = sphi 0, %s166
      %s181 = sphi 0, %s167
      %s185 = sphi 0, %s185
      %s187 = sphi 0, %s185
      %s188 = sphi 0, %s187
      %s202 = sphi 0, %s188
      %s206 = sphi 0, %s206
      %s208 = sphi 0, %s206
      %s209 = sphi 0, %s208
      %s223 = sphi 0, %s209
      %s227 = sphi 0, %s227
      %s229 = sphi 0, %s227
      %s230 = sphi 0, %s229
      %s244 = sphi 0, %s230
      %s248 = sphi 0, %s248
      %s250 = sphi 0, %s248
      %s251 = sphi 0, %s250
      %s265 = sphi 0, %s251
      %s269 = sphi 0, %s269
      %s271 = sphi 0, %s269
      %s272 = sphi 0, %s271
      %s286 = sphi 0, %s272
      %s290 = sphi 0, %s290
      %s292 = sphi 0, %s290
      %s293 = sphi 0, %s292
      %s307 = sphi 0, %s293
      %s313 = sphi 0, %s315
      %s316 = sphi 0, %s313
      %s317 = sphi 0, %s316
      %s333 = sphi 0, %s317
    $region4: #{tpu_custom_call.1} parent=1 // loop_header_branch
      %28 = sbr.rel (%p26) target = $region8
    $region5: #{tpu_custom_call.1} parent=1 // loop_body
      %s30 = ssub.s32 %s25, 1
      %s31 = ssub.s32 %s25, 2
      %s32 = sadd.s32 %s25, 1
      %s33 = ssub.s32 %s25, %s32
      %p34 = scmp.eq.s32.totalorder %s33, 0
      %s36 = sadd.s32 %s35, 1
      %s37 = scalar_select %p34, %s35, %s36
      %p40 = pneg %p34
      %p41 = scmp.eq.s32.totalorder %s25, 1
      %p42 = por %p40, %p41
      %p43 = scmp.ne.s32.totalorder %s35, %s38
      %p44 = scmp.eq.s32.totalorder %s25, 0
      %p45 = por %p43, %p44
      %p46 = scmp.ne.s32.totalorder %s35, %s38
      %p47 = scmp.eq.s32.totalorder %s30, 1
      %p48 = por %p46, %p47
      %p49 = scmp.ne.s32.totalorder %s38, %s39
      %p50 = scmp.eq.s32.totalorder %s30, 0
      %p51 = por %p49, %p50
      %p52 = scmp.ne.s32.totalorder %s38, %s39
      %p53 = scmp.eq.s32.totalorder %s31, 1
      %p54 = por %p52, %p53
      %p56 = scmp.ne.s32.totalorder %s39, %s55
      %p57 = scmp.eq.s32.totalorder %s31, 0
      %p58 = por %p56, %p57
      %s60 = sadd.s32 %s59, 1
      %p63 = scmp.eq.s32.totalorder %s25, 1
      %p64 = scmp.ne.s32.totalorder %s59, %s61
      %p65 = scmp.eq.s32.totalorder %s25, 0
      %p66 = por %p64, %p65
      %p67 = scmp.ne.s32.totalorder %s59, %s61
      %p68 = scmp.eq.s32.totalorder %s30, 1
      %p69 = por %p67, %p68
      %p70 = scmp.ne.s32.totalorder %s61, %s62
      %p71 = scmp.eq.s32.totalorder %s30, 0
      %p72 = por %p70, %p71
      %p73 = scmp.ne.s32.totalorder %s61, %s62
      %p74 = scmp.eq.s32.totalorder %s31, 1
      %p75 = por %p73, %p74
      %p77 = scmp.ne.s32.totalorder %s62, %s76
      %p78 = scmp.eq.s32.totalorder %s31, 0
      %p79 = por %p77, %p78
      %s81 = sadd.s32 %s80, 1
      %p84 = scmp.eq.s32.totalorder %s25, 1
      %p85 = scmp.ne.s32.totalorder %s80, %s82
      %p86 = scmp.eq.s32.totalorder %s25, 0
      %p87 = por %p85, %p86
      %p88 = scmp.ne.s32.totalorder %s80, %s82
      %p89 = scmp.eq.s32.totalorder %s30, 1
      %p90 = por %p88, %p89
      %p91 = scmp.ne.s32.totalorder %s82, %s83
      %p92 = scmp.eq.s32.totalorder %s30, 0
      %p93 = por %p91, %p92
      %p94 = scmp.ne.s32.totalorder %s82, %s83
      %p95 = scmp.eq.s32.totalorder %s31, 1
      %p96 = por %p94, %p95
      %p98 = scmp.ne.s32.totalorder %s83, %s97
      %p99 = scmp.eq.s32.totalorder %s31, 0
      %p100 = por %p98, %p99
      %s102 = sadd.s32 %s101, 1
      %p105 = scmp.eq.s32.totalorder %s25, 1
      %p106 = scmp.ne.s32.totalorder %s101, %s103
      %p107 = scmp.eq.s32.totalorder %s25, 0
      %p108 = por %p106, %p107
      %p109 = scmp.ne.s32.totalorder %s101, %s103
      %p110 = scmp.eq.s32.totalorder %s30, 1
      %p111 = por %p109, %p110
      %p112 = scmp.ne.s32.totalorder %s103, %s104
      %p113 = scmp.eq.s32.totalorder %s30, 0
      %p114 = por %p112, %p113
      %p115 = scmp.ne.s32.totalorder %s103, %s104
      %p116 = scmp.eq.s32.totalorder %s31, 1
      %p117 = por %p115, %p116
      %p119 = scmp.ne.s32.totalorder %s104, %s118
      %p120 = scmp.eq.s32.totalorder %s31, 0
      %p121 = por %p119, %p120
      %s123 = sadd.s32 %s122, 1
      %p126 = scmp.eq.s32.totalorder %s25, 1
      %p127 = scmp.ne.s32.totalorder %s122, %s124
      %p128 = scmp.eq.s32.totalorder %s25, 0
      %p129 = por %p127, %p128
      %p130 = scmp.ne.s32.totalorder %s122, %s124
      %p131 = scmp.eq.s32.totalorder %s30, 1
      %p132 = por %p130, %p131
      %p133 = scmp.ne.s32.totalorder %s124, %s125
      %p134 = scmp.eq.s32.totalorder %s30, 0
      %p135 = por %p133, %p134
      %p136 = scmp.ne.s32.totalorder %s124, %s125
      %p137 = scmp.eq.s32.totalorder %s31, 1
      %p138 = por %p136, %p137
      %p140 = scmp.ne.s32.totalorder %s125, %s139
      %p141 = scmp.eq.s32.totalorder %s31, 0
      %p142 = por %p140, %p141
      %s144 = sadd.s32 %s143, 1
      %p147 = scmp.eq.s32.totalorder %s25, 1
      %p148 = scmp.ne.s32.totalorder %s143, %s145
      %p149 = scmp.eq.s32.totalorder %s25, 0
      %p150 = por %p148, %p149
      %p151 = scmp.ne.s32.totalorder %s143, %s145
      %p152 = scmp.eq.s32.totalorder %s30, 1
      %p153 = por %p151, %p152
      %p154 = scmp.ne.s32.totalorder %s145, %s146
      %p155 = scmp.eq.s32.totalorder %s30, 0
      %p156 = por %p154, %p155
      %p157 = scmp.ne.s32.totalorder %s145, %s146
      %p158 = scmp.eq.s32.totalorder %s31, 1
      %p159 = por %p157, %p158
      %p161 = scmp.ne.s32.totalorder %s146, %s160
      %p162 = scmp.eq.s32.totalorder %s31, 0
      %p163 = por %p161, %p162
      %s165 = sadd.s32 %s164, 1
      %p168 = scmp.eq.s32.totalorder %s25, 1
      %p169 = scmp.ne.s32.totalorder %s164, %s166
      %p170 = scmp.eq.s32.totalorder %s25, 0
      %p171 = por %p169, %p170
      %p172 = scmp.ne.s32.totalorder %s164, %s166
      %p173 = scmp.eq.s32.totalorder %s30, 1
      %p174 = por %p172, %p173
      %p175 = scmp.ne.s32.totalorder %s166, %s167
      %p176 = scmp.eq.s32.totalorder %s30, 0
      %p177 = por %p175, %p176
      %p178 = scmp.ne.s32.totalorder %s166, %s167
      %p179 = scmp.eq.s32.totalorder %s31, 1
      %p180 = por %p178, %p179
      %p182 = scmp.ne.s32.totalorder %s167, %s181
      %p183 = scmp.eq.s32.totalorder %s31, 0
      %p184 = por %p182, %p183
      %s186 = sadd.s32 %s185, 1
      %p189 = scmp.eq.s32.totalorder %s25, 1
      %p190 = scmp.ne.s32.totalorder %s185, %s187
      %p191 = scmp.eq.s32.totalorder %s25, 0
      %p192 = por %p190, %p191
      %p193 = scmp.ne.s32.totalorder %s185, %s187
      %p194 = scmp.eq.s32.totalorder %s30, 1
      %p195 = por %p193, %p194
      %p196 = scmp.ne.s32.totalorder %s187, %s188
      %p197 = scmp.eq.s32.totalorder %s30, 0
      %p198 = por %p196, %p197
      %p199 = scmp.ne.s32.totalorder %s187, %s188
      %p200 = scmp.eq.s32.totalorder %s31, 1
      %p201 = por %p199, %p200
      %p203 = scmp.ne.s32.totalorder %s188, %s202
      %p204 = scmp.eq.s32.totalorder %s31, 0
      %p205 = por %p203, %p204
      %s207 = sadd.s32 %s206, 1
      %p210 = scmp.eq.s32.totalorder %s25, 1
      %p211 = scmp.ne.s32.totalorder %s206, %s208
      %p212 = scmp.eq.s32.totalorder %s25, 0
      %p213 = por %p211, %p212
      %p214 = scmp.ne.s32.totalorder %s206, %s208
      %p215 = scmp.eq.s32.totalorder %s30, 1
      %p216 = por %p214, %p215
      %p217 = scmp.ne.s32.totalorder %s208, %s209
      %p218 = scmp.eq.s32.totalorder %s30, 0
      %p219 = por %p217, %p218
      %p220 = scmp.ne.s32.totalorder %s208, %s209
      %p221 = scmp.eq.s32.totalorder %s31, 1
      %p222 = por %p220, %p221
      %p224 = scmp.ne.s32.totalorder %s209, %s223
      %p225 = scmp.eq.s32.totalorder %s31, 0
      %p226 = por %p224, %p225
      %s228 = sadd.s32 %s227, 1
      %p231 = scmp.eq.s32.totalorder %s25, 1
      %p232 = scmp.ne.s32.totalorder %s227, %s229
      %p233 = scmp.eq.s32.totalorder %s25, 0
      %p234 = por %p232, %p233
      %p235 = scmp.ne.s32.totalorder %s227, %s229
      %p236 = scmp.eq.s32.totalorder %s30, 1
      %p237 = por %p235, %p236
      %p238 = scmp.ne.s32.totalorder %s229, %s230
      %p239 = scmp.eq.s32.totalorder %s30, 0
      %p240 = por %p238, %p239
      %p241 = scmp.ne.s32.totalorder %s229, %s230
      %p242 = scmp.eq.s32.totalorder %s31, 1
      %p243 = por %p241, %p242
      %p245 = scmp.ne.s32.totalorder %s230, %s244
      %p246 = scmp.eq.s32.totalorder %s31, 0
      %p247 = por %p245, %p246
      %s249 = sadd.s32 %s248, 1
      %p252 = scmp.eq.s32.totalorder %s25, 1
      %p253 = scmp.ne.s32.totalorder %s248, %s250
      %p254 = scmp.eq.s32.totalorder %s25, 0
      %p255 = por %p253, %p254
      %p256 = scmp.ne.s32.totalorder %s248, %s250
      %p257 = scmp.eq.s32.totalorder %s30, 1
      %p258 = por %p256, %p257
      %p259 = scmp.ne.s32.totalorder %s250, %s251
      %p260 = scmp.eq.s32.totalorder %s30, 0
      %p261 = por %p259, %p260
      %p262 = scmp.ne.s32.totalorder %s250, %s251
      %p263 = scmp.eq.s32.totalorder %s31, 1
      %p264 = por %p262, %p263
      %p266 = scmp.ne.s32.totalorder %s251, %s265
      %p267 = scmp.eq.s32.totalorder %s31, 0
      %p268 = por %p266, %p267
      %s270 = sadd.s32 %s269, 1
      %p273 = scmp.eq.s32.totalorder %s25, 1
      %p274 = scmp.ne.s32.totalorder %s269, %s271
      %p275 = scmp.eq.s32.totalorder %s25, 0
      %p276 = por %p274, %p275
      %p277 = scmp.ne.s32.totalorder %s269, %s271
      %p278 = scmp.eq.s32.totalorder %s30, 1
      %p279 = por %p277, %p278
      %p280 = scmp.ne.s32.totalorder %s271, %s272
      %p281 = scmp.eq.s32.totalorder %s30, 0
      %p282 = por %p280, %p281
      %p283 = scmp.ne.s32.totalorder %s271, %s272
      %p284 = scmp.eq.s32.totalorder %s31, 1
      %p285 = por %p283, %p284
      %p287 = scmp.ne.s32.totalorder %s272, %s286
      %p288 = scmp.eq.s32.totalorder %s31, 0
      %p289 = por %p287, %p288
      %s291 = sadd.s32 %s290, 1
      %p294 = scmp.eq.s32.totalorder %s25, 1
      %p295 = scmp.ne.s32.totalorder %s290, %s292
      %p296 = scmp.eq.s32.totalorder %s25, 0
      %p297 = por %p295, %p296
      %p298 = scmp.ne.s32.totalorder %s290, %s292
      %p299 = scmp.eq.s32.totalorder %s30, 1
      %p300 = por %p298, %p299
      %p301 = scmp.ne.s32.totalorder %s292, %s293
      %p302 = scmp.eq.s32.totalorder %s30, 0
      %p303 = por %p301, %p302
      %p304 = scmp.ne.s32.totalorder %s292, %s293
      %p305 = scmp.eq.s32.totalorder %s31, 1
      %p306 = por %p304, %p305
      %p308 = scmp.ne.s32.totalorder %s293, %s307
      %p309 = scmp.eq.s32.totalorder %s31, 0
      %p310 = por %p308, %p309
      %s311 = ssub.s32 %s25, %s32
      %p312 = scmp.eq.s32.totalorder %s311, 0
      %s314 = sadd.s32 %s313, 1
      %s315 = scalar_select %p312, %s313, %s314
      %p318 = pneg %p312
      %p319 = scmp.eq.s32.totalorder %s25, 1
      %p320 = por %p318, %p319
      %p321 = scmp.ne.s32.totalorder %s313, %s316
      %p322 = scmp.eq.s32.totalorder %s25, 0
      %p323 = por %p321, %p322
      %p324 = scmp.ne.s32.totalorder %s313, %s316
      %p325 = scmp.eq.s32.totalorder %s30, 1
      %p326 = por %p324, %p325
      %p327 = scmp.ne.s32.totalorder %s316, %s317
      %p328 = scmp.eq.s32.totalorder %s30, 0
      %p329 = por %p327, %p328
      %p330 = scmp.ne.s32.totalorder %s316, %s317
      %p331 = scmp.eq.s32.totalorder %s31, 1
      %p332 = por %p330, %p331
      %p334 = scmp.ne.s32.totalorder %s317, %s333
      %p335 = scmp.eq.s32.totalorder %s31, 0
      %p336 = por %p334, %p335
      %p337 = scmp.le.s32.totalorder 1, %s25
      %p338 = scmp.lt.s32.totalorder %s25, 3
      %p339 = pnand %p337, %p338
      %p340 = pneg %p339
      // Predicated region
      $region9: #{tpu_custom_call.1} parent=5 // pred_check
        _
      $region10: #{tpu_custom_call.1} parent=5 // pred_check_branch
        %342 = sbr.rel (%p339) target = $region12
      $region11: #{tpu_custom_call.1} parent=5 // pred_region
        %s343 = ssub.s32 %s25, 1
        // Predicated region
        $region13: #{tpu_custom_call.1} parent=11 // pred_check
          %p344 = pneg %p72
        $region14: #{tpu_custom_call.1} parent=11 // pred_check_branch
          %346 = sbr.rel (%p344) target = $region16
        $region15: #{tpu_custom_call.1} parent=11 // pred_region
          _
        $region16: #{tpu_custom_call.1} parent=11 // pred_fallthru
          _
        // Predicated region
        $region17: #{tpu_custom_call.1} parent=11 // pred_check
          %p347 = pneg %p93
        $region18: #{tpu_custom_call.1} parent=11 // pred_check_branch
          %349 = sbr.rel (%p347) target = $region20
        $region19: #{tpu_custom_call.1} parent=11 // pred_region
          _
        $region20: #{tpu_custom_call.1} parent=11 // pred_fallthru
          _
        // Predicated region
        $region21: #{tpu_custom_call.1} parent=11 // pred_check
          %p350 = pneg %p114
        $region22: #{tpu_custom_call.1} parent=11 // pred_check_branch
          %352 = sbr.rel (%p350) target = $region24
        $region23: #{tpu_custom_call.1} parent=11 // pred_region
          _
        $region24: #{tpu_custom_call.1} parent=11 // pred_fallthru
          _
        // Predicated region
        $region25: #{tpu_custom_call.1} parent=11 // pred_check
          %p353 = pneg %p135
        $region26: #{tpu_custom_call.1} parent=11 // pred_check_branch
          %355 = sbr.rel (%p353) target = $region28
        $region27: #{tpu_custom_call.1} parent=11 // pred_region
          %s357 = ssub.s32 16, 16
          %358 = vsyncadd [#allocation4], %s357
          %s360 = sshll.u32 [#allocation3], 4
          %s361 = int_to_ptr.vmem [resolvable:$true] %s360
          %363 = dma.hbm_to_vmem [thread:$0]  %s4, 16, %s361, [#allocation4]
        $region28: #{tpu_custom_call.1} parent=11 // pred_fallthru
          _
        // Predicated region
        $region29: #{tpu_custom_call.1} parent=11 // pred_check
          %p364 = pneg %p156
        $region30: #{tpu_custom_call.1} parent=11 // pred_check_branch
          %366 = sbr.rel (%p364) target = $region32
        $region31: #{tpu_custom_call.1} parent=11 // pred_region
          _
        $region32: #{tpu_custom_call.1} parent=11 // pred_fallthru
          _
        // Predicated region
        $region33: #{tpu_custom_call.1} parent=11 // pred_check
          %p367 = pneg %p177
        $region34: #{tpu_custom_call.1} parent=11 // pred_check_branch
          %369 = sbr.rel (%p367) target = $region36
        $region35: #{tpu_custom_call.1} parent=11 // pred_region
          %s371 = ssub.s32 16, 16
          %372 = vsyncadd [#allocation7], %s371
          %s374 = sshll.u32 [#allocation6], 4
          %s375 = int_to_ptr.vmem [resolvable:$true] %s374
          %377 = dma.hbm_to_vmem [thread:$0]  %s6, 16, %s375, [#allocation7]
        $region36: #{tpu_custom_call.1} parent=11 // pred_fallthru
          _
        // Predicated region
        $region37: #{tpu_custom_call.1} parent=11 // pred_check
          %p378 = pneg %p198
        $region38: #{tpu_custom_call.1} parent=11 // pred_check_branch
          %380 = sbr.rel (%p378) target = $region40
        $region39: #{tpu_custom_call.1} parent=11 // pred_region
          %s382 = ssub.s32 16, 16
          %383 = vsyncadd [#allocation7], %s382
          %s385 = sshll.u32 [#allocation8], 4
          %s386 = int_to_ptr.vmem [resolvable:$true] %s385
          %388 = dma.hbm_to_vmem [thread:$0]  %s7, 16, %s386, [#allocation7]
        $region40: #{tpu_custom_call.1} parent=11 // pred_fallthru
          _
        // Predicated region
        $region41: #{tpu_custom_call.1} parent=11 // pred_check
          %p389 = pneg %p219
        $region42: #{tpu_custom_call.1} parent=11 // pred_check_branch
          %391 = sbr.rel (%p389) target = $region44
        $region43: #{tpu_custom_call.1} parent=11 // pred_region
          %s393 = ssub.s32 16, 16
          %394 = vsyncadd [#allocation10], %s393
          %s396 = sshll.u32 [#allocation9], 4
          %s397 = int_to_ptr.vmem [resolvable:$true] %s396
          %399 = dma.hbm_to_vmem [thread:$0]  %s8, 16, %s397, [#allocation10]
        $region44: #{tpu_custom_call.1} parent=11 // pred_fallthru
          _
        // Predicated region
        $region45: #{tpu_custom_call.1} parent=11 // pred_check
          %p400 = pneg %p240
        $region46: #{tpu_custom_call.1} parent=11 // pred_check_branch
          %402 = sbr.rel (%p400) target = $region48
        $region47: #{tpu_custom_call.1} parent=11 // pred_region
          _
        $region48: #{tpu_custom_call.1} parent=11 // pred_fallthru
          _
        // Predicated region
        $region49: #{tpu_custom_call.1} parent=11 // pred_check
          %p403 = pneg %p261
        $region50: #{tpu_custom_call.1} parent=11 // pred_check_branch
          %405 = sbr.rel (%p403) target = $region52
        $region51: #{tpu_custom_call.1} parent=11 // pred_region
          _
        $region52: #{tpu_custom_call.1} parent=11 // pred_fallthru
          _
        // Predicated region
        $region53: #{tpu_custom_call.1} parent=11 // pred_check
          %p406 = pneg %p282
        $region54: #{tpu_custom_call.1} parent=11 // pred_check_branch
          %408 = sbr.rel (%p406) target = $region56
        $region55: #{tpu_custom_call.1} parent=11 // pred_region
          _
        $region56: #{tpu_custom_call.1} parent=11 // pred_fallthru
          _
        // Predicated region
        $region57: #{tpu_custom_call.1} parent=11 // pred_check
          %p409 = pneg %p303
        $region58: #{tpu_custom_call.1} parent=11 // pred_check_branch
          %411 = sbr.rel (%p409) target = $region60
        $region59: #{tpu_custom_call.1} parent=11 // pred_region
          _
        $region60: #{tpu_custom_call.1} parent=11 // pred_fallthru
          _
      $region12: #{tpu_custom_call.1} parent=5 // pred_fallthru
        _
      %p412 = scmp.lt.s32.totalorder %s25, 2
      // Predicated region
      $region61: #{tpu_custom_call.1} parent=5 // pred_check
        %p413 = pneg %p412
      $region62: #{tpu_custom_call.1} parent=5 // pred_check_branch
        %415 = sbr.rel (%p413) target = $region64
      $region63: #{tpu_custom_call.1} parent=5 // pred_region
        // Predicated region
        $region65: #{tpu_custom_call.1} parent=63 // pred_check
          %p416 = pneg %p45
        $region66: #{tpu_custom_call.1} parent=63 // pred_check_branch
          %418 = sbr.rel (%p416) target = $region68
        $region67: #{tpu_custom_call.1} parent=63 // pred_region
          %p419 = scmp.lt.s32.totalorder %s25, 1
          %s420 = scalar_select %p419, %s25, 1
          %s421 = smul.addr %s420, 8
          %s422 = scalar_lea.vmem %s0, %s421
        $region68: #{tpu_custom_call.1} parent=63 // pred_fallthru
          _
      $region64: #{tpu_custom_call.1} parent=5 // pred_fallthru
        _
      %p423 = scmp.le.s32.totalorder 1, %s25
      %p424 = scmp.lt.s32.totalorder %s25, 3
      %p425 = pnand %p423, %p424
      %p426 = pneg %p425
      // Predicated region
      $region69: #{tpu_custom_call.1} parent=5 // pred_check
        _
      $region70: #{tpu_custom_call.1} parent=5 // pred_check_branch
        %428 = sbr.rel (%p425) target = $region72
      $region71: #{tpu_custom_call.1} parent=5 // pred_region
        %s429 = ssub.s32 %s25, 1
        // Predicated region
        $region73: #{tpu_custom_call.1} parent=71 // pred_check
          %p430 = pneg %p135
        $region74: #{tpu_custom_call.1} parent=71 // pred_check_branch
          %432 = sbr.rel (%p430) target = $region76
        $region75: #{tpu_custom_call.1} parent=71 // pred_region
          %433 = dma.done [#allocation4], 16
        $region76: #{tpu_custom_call.1} parent=71 // pred_fallthru
          _
        // Predicated region
        $region77: #{tpu_custom_call.1} parent=71 // pred_check
          %p434 = pneg %p177
        $region78: #{tpu_custom_call.1} parent=71 // pred_check_branch
          %436 = sbr.rel (%p434) target = $region80
        $region79: #{tpu_custom_call.1} parent=71 // pred_region
          %437 = dma.done [#allocation7], 16
        $region80: #{tpu_custom_call.1} parent=71 // pred_fallthru
          _
        // Predicated region
        $region81: #{tpu_custom_call.1} parent=71 // pred_check
          %p438 = pneg %p198
        $region82: #{tpu_custom_call.1} parent=71 // pred_check_branch
          %440 = sbr.rel (%p438) target = $region84
        $region83: #{tpu_custom_call.1} parent=71 // pred_region
          %441 = dma.done [#allocation7], 16
        $region84: #{tpu_custom_call.1} parent=71 // pred_fallthru
          _
        // Predicated region
        $region85: #{tpu_custom_call.1} parent=71 // pred_check
          %p442 = pneg %p219
        $region86: #{tpu_custom_call.1} parent=71 // pred_check_branch
          %444 = sbr.rel (%p442) target = $region88
        $region87: #{tpu_custom_call.1} parent=71 // pred_region
          %445 = dma.done [#allocation10], 16
        $region88: #{tpu_custom_call.1} parent=71 // pred_fallthru
          _
        %p446 = scmp.lt.s32.totalorder %s30, 1
        %s447 = scalar_select %p446, %s30, 1
        %s448 = smul.addr %s447, 8
        %s449 = scalar_lea.vmem %s0, %s448
        %p450 = pneg %p51
        %p451 = pneg %p48
        %p452 = pneg %p72
        %p453 = pneg %p69
        %p454 = pneg %p93
        %p455 = pneg %p90
        %p456 = pneg %p114
        %p457 = pneg %p111
        %p458 = pneg %p135
        %p459 = pneg %p132
        %p460 = pneg %p156
        %p461 = pneg %p153
        %p462 = pneg %p177
        %p463 = pneg %p174
        %p464 = pneg %p198
        %p465 = pneg %p195
        %p466 = pneg %p219
        %p467 = pneg %p216
        %p468 = pneg %p240
        %p469 = pneg %p237
        %p470 = pneg %p261
        %p471 = pneg %p258
        %p472 = pneg %p282
        %p473 = pneg %p279
        %p474 = pneg %p303
        %p475 = pneg %p300
        %p476 = pneg %p329
        %p477 = pneg %p326
        %s478 = sand.u32 %s316, 1
        %s479 = scalar_lea.sflag [#allocation5], %s478
        %s480 = sand.u32 %s316, 1
        %s481 = smul.addr %s480, 8
        %s482 = scalar_lea.vmem [#allocation11], %s481
        %p483 = scmp.lt.s32.totalorder %s30, 1
        %s484 = scalar_select %p483, %s30, 1
        %s485 = smul.addr %s484, 8
        %s486 = scalar_lea.vmem %s0, %s485
        %v488 = vld [vmem:[%s486] sm:$0xff]
        %v489 = vld [vmem:[%s1] sm:$0x1]
        %v490 = vld [vmem:[%s2] sm:$0x1]
        %vm491 = vcmask 261120
        %v492 = vsel %vm491, %v488, 0.0
        %493 = vadd.xlane.f32.xlu0 %v492
        %v494 = vpop.xlane.xlu0 %493
        %v495 = vrcp.pop 32.0
        %v496 = vmul.f32 %v494, %v495
        %v497 = vsub.f32 %v488, %v496
        %v498 = vmul.f32 %v497, %v497
        %v499 = vsel %vm491, %v498, 0.0
        %500 = vadd.xlane.f32.xlu0 %v499
        %v501 = vpop.xlane.xlu0 %500
        %v502 = vmul.f32 %v501, %v495
        %v503 = vadd.f32 %v502, 1e-05
        %v504 = vrsqrt.pop %v503
        %v505 = vmul.f32 %v497, %v504
        %v507 = vlaneseq
        %v508 = vshrl.u32 %v507, 7
        %v509 = vsub.s32 0, %v508
        %v510 = vrot.slane %v489, %v509
        %v512 = vmul.f32 %v505, %v510
        %v514 = vlaneseq
        %v515 = vshrl.u32 %v514, 7
        %v516 = vsub.s32 0, %v515
        %v517 = vrot.slane %v490, %v516
        %v519 = vadd.f32 %v512, %v517
        %v520 = vpack.c.bf16 %v519, %v519
        %v521 = vld [vmem:[%s3] sm:$0xf]
        %v522 = vld [vmem:[%s3 + $0x4] sm:$0xf]
        %v523 = vld [vmem:[%s3 + $0x8] sm:$0xf]
        %v524 = vld [vmem:[%s3 + $0xc] sm:$0xf]
        %v525 = vld [vmem:[#allocation3] sm:$0x1]
        %v527 = vlaneseq
        %v528 = vshrl.u32 %v527, 7
        %v529 = vsub.s32 0, %v528
        %v530 = vrot.slane %v525, %v529
        %v536 = vunpack.c.l.b16 %v521
        %v537 = vunpack.c.l.b16 %v522
        %v538 = vunpack.c.l.b16 %v523
        %v539 = vunpack.c.l.b16 %v524
        %v540 = vpack.c.b16 %v537, %v536
        %v541 = vpack.c.b16 %v539, %v538
        %v545 = vsel %vm491, %v520, 0
        %547 = vmatprep.subr.bf16.mxu0 0
        %548 = vmatpush1.bf16.msra.mxu0 %v540
        %549 = vmatprep.subr.bf16.mxu0 0
        %550 = vmatpush1.bf16.msra.mxu0 %v541
        %551 = vmatprep.subr.bf16.mxu0 0
        %552 = vmatpush1.bf16.msra.mxu0 0
        %553 = vmatprep.subr.bf16.mxu0 0
        %554 = vmatpush1.bf16.msra.mxu0 0
        %555 = vmatprep.subr.bf16.mxu0 0
        %556 = vmatpush1.bf16.msra.mxu0 0
        %557 = vmatprep.subr.bf16.mxu0 0
        %558 = vmatpush1.bf16.msra.mxu0 0
        %559 = vmatprep.subr.bf16.mxu0 0
        %560 = vmatpush1.bf16.msra.mxu0 0
        %561 = vmatprep.subr.bf16.mxu0 0
        %562 = vmatpush1.bf16.msra.mxu0 0
        %563 = vmatprep.subr.bf16.mxu0 0
        %564 = vmatpush1.bf16.msra.mxu0 0
        %565 = vmatprep.subr.bf16.mxu0 0
        %566 = vmatpush1.bf16.msra.mxu0 0
        %567 = vmatprep.subr.bf16.mxu0 0
        %568 = vmatpush1.bf16.msra.mxu0 0
        %569 = vmatprep.subr.bf16.mxu0 0
        %570 = vmatpush1.bf16.msra.mxu0 0
        %571 = vmatprep.subr.bf16.mxu0 0
        %572 = vmatpush1.bf16.msra.mxu0 0
        %573 = vmatprep.subr.bf16.mxu0 0
        %574 = vmatpush1.bf16.msra.mxu0 0
        %575 = vmatprep.subr.bf16.mxu0 0
        %576 = vmatpush1.bf16.msra.mxu0 0
        %577 = vmatprep.subr.bf16.mxu0 0
        %578 = vmatpush1.bf16.msra.mxu0 0
        %579 = vmatprep.mubr.bf16.mxu0 0
        %580 = vmatmul.mubr.bf16.gmra.mrb[0].mxu0 %v545
        %v581 = vpop.f32.mrb[0].mxu0
        %v582 = vadd.f32 %v530, %v581
        %v583 = vpop.f32.mrb[0].mxu0
        %v584 = vpop.f32.mrb[0].mxu0
        %v585 = vpop.f32.mrb[0].mxu0
        %586 = vdwg.mxu0
        %v587 = vpack.c.bf16 %v582, %v582
        %589 = vrot.lane.b32.xlu0 %v587, 96
        %v590 = vpop.permute.xlu0 %589
        %vm591 = vcmask 64512
        %v593 = vsel %vm591, %v587, 0
        %v596 = vsel %vm591, %v590, 0
        %598 = vmatprep.subr.bf16.mxu0 0
        %599 = vmatpush1.bf16.xpose.msra.mxu0 %v596
        %600 = vmatprep.subr.bf16.mxu0 0
        %601 = vmatpush1.bf16.xpose.msra.mxu0 0
        %602 = vmatprep.subr.bf16.mxu0 0
        %603 = vmatpush1.bf16.xpose.msra.mxu0 0
        %604 = vmatprep.subr.bf16.mxu0 0
        %605 = vmatpush1.bf16.xpose.msra.mxu0 0
        %606 = vmatprep.subr.bf16.mxu0 0
        %607 = vmatpush1.bf16.xpose.msra.mxu0 0
        %608 = vmatprep.subr.bf16.mxu0 0
        %609 = vmatpush1.bf16.xpose.msra.mxu0 0
        %610 = vmatprep.subr.bf16.mxu0 0
        %611 = vmatpush1.bf16.xpose.msra.mxu0 0
        %612 = vmatprep.subr.bf16.mxu0 0
        %613 = vmatpush1.bf16.xpose.msra.mxu0 0
        %614 = vmatprep.subr.bf16.mxu0 0
        %615 = vmatpush1.bf16.xpose.msra.mxu0 0
        %616 = vmatprep.subr.bf16.mxu0 0
        %617 = vmatpush1.bf16.xpose.msra.mxu0 0
        %618 = vmatprep.subr.bf16.mxu0 0
        %619 = vmatpush1.bf16.xpose.msra.mxu0 0
        %620 = vmatprep.subr.bf16.mxu0 0
        %621 = vmatpush1.bf16.xpose.msra.mxu0 0
        %622 = vmatprep.subr.bf16.mxu0 0
        %623 = vmatpush1.bf16.xpose.msra.mxu0 0
        %624 = vmatprep.subr.bf16.mxu0 0
        %625 = vmatpush1.bf16.xpose.msra.mxu0 0
        %626 = vmatprep.subr.bf16.mxu0 0
        %627 = vmatpush1.bf16.xpose.msra.mxu0 0
        %628 = vmatprep.subr.bf16.mxu0 0
        %629 = vmatpush1.bf16.xpose.msra.mxu0 0
        %630 = vmatprep.mubr.bf16.mxu0 0
        %631 = vmatmul.mubr.bf16.gmra.mrb[0].mxu0 %v593
        %v632 = vpop.f32.mrb[0].mxu0
        %v633 = vadd.f32 0.0, %v632
        %v634 = vpop.f32.mrb[0].mxu0
        %v635 = vpop.f32.mrb[0].mxu0
        %v636 = vpop.f32.mrb[0].mxu0
        %637 = vdwg.mxu0
        %v638 = vsel %vm591, %v633, -inf
        %639 = vmax.xlane.f32.xlu0 %v638
        %v640 = vpop.xlane.xlu0 %639
        %v641 = vsub.f32 %v633, %v640
        %v642 = vmul.f32 %v641, 1.442695
        %v643 = vpow.pop %v642
        %v644 = vsel %vm591, %v643, 0.0
        %645 = vadd.xlane.f32.xlu0 %v644
        %v646 = vpop.xlane.xlu0 %645
        %v647 = vpack.c.bf16 %v643, %v643
        %648 = vrot.lane.b32.xlu0 %v587, 64
        %v649 = vpop.permute.xlu0 %648
        %v651 = vsel %vm591, %v647, 0
        %vm653 = vcmask 1043456
        %v655 = vsel %vm653, %v649, 0
        %657 = vmatprep.subr.bf16.mxu0 0
        %658 = vmatpush1.bf16.msra.mxu0 %v655
        %659 = vmatprep.subr.bf16.mxu0 0
        %660 = vmatpush1.bf16.msra.mxu0 0
        %661 = vmatprep.subr.bf16.mxu0 0
        %662 = vmatpush1.bf16.msra.mxu0 0
        %663 = vmatprep.subr.bf16.mxu0 0
        %664 = vmatpush1.bf16.msra.mxu0 0
        %665 = vmatprep.subr.bf16.mxu0 0
        %666 = vmatpush1.bf16.msra.mxu0 0
        %667 = vmatprep.subr.bf16.mxu0 0
        %668 = vmatpush1.bf16.msra.mxu0 0
        %669 = vmatprep.subr.bf16.mxu0 0
        %670 = vmatpush1.bf16.msra.mxu0 0
        %671 = vmatprep.subr.bf16.mxu0 0
        %672 = vmatpush1.bf16.msra.mxu0 0
        %673 = vmatprep.subr.bf16.mxu0 0
        %674 = vmatpush1.bf16.msra.mxu0 0
        %675 = vmatprep.subr.bf16.mxu0 0
        %676 = vmatpush1.bf16.msra.mxu0 0
        %677 = vmatprep.subr.bf16.mxu0 0
        %678 = vmatpush1.bf16.msra.mxu0 0
        %679 = vmatprep.subr.bf16.mxu0 0
        %680 = vmatpush1.bf16.msra.mxu0 0
        %681 = vmatprep.subr.bf16.mxu0 0
        %682 = vmatpush1.bf16.msra.mxu0 0
        %683 = vmatprep.subr.bf16.mxu0 0
        %684 = vmatpush1.bf16.msra.mxu0 0
        %685 = vmatprep.subr.bf16.mxu0 0
        %686 = vmatpush1.bf16.msra.mxu0 0
        %687 = vmatprep.subr.bf16.mxu0 0
        %688 = vmatpush1.bf16.msra.mxu0 0
        %689 = vmatprep.mubr.bf16.mxu0 0
        %690 = vmatmul.mubr.bf16.gmra.mrb[0].mxu0 %v651
        %v691 = vpop.f32.mrb[0].mxu0
        %v692 = vadd.f32 0.0, %v691
        %v693 = vpop.f32.mrb[0].mxu0
        %v694 = vpop.f32.mrb[0].mxu0
        %v695 = vpop.f32.mrb[0].mxu0
        %696 = vdwg.mxu0
        %v697 = vrcp.pop %v646
        %v698 = vmul.f32 %v692, %v697
        %v699 = vpack.c.bf16 %v698, %v698
        %vm700 = vcmask 60416
        %701 = vst.msk [vmem:[#allocation2] sm:$0xf] %vm700, %v699
        %702 = vrot.lane.b32.xlu0 %v587, 120
        %v703 = vpop.permute.xlu0 %702
        %704 = vrot.lane.b32.xlu0 %v587, 88
        %v705 = vpop.permute.xlu0 %704
        %v707 = vsel %vm591, %v703, 0
        %v710 = vsel %vm591, %v705, 0
        %712 = vmatprep.subr.bf16.mxu0 0
        %713 = vmatpush1.bf16.xpose.msra.mxu0 %v710
        %714 = vmatprep.subr.bf16.mxu0 0
        %715 = vmatpush1.bf16.xpose.msra.mxu0 0
        %716 = vmatprep.subr.bf16.mxu0 0
        %717 = vmatpush1.bf16.xpose.msra.mxu0 0
        %718 = vmatprep.subr.bf16.mxu0 0
        %719 = vmatpush1.bf16.xpose.msra.mxu0 0
        %720 = vmatprep.subr.bf16.mxu0 0
        %721 = vmatpush1.bf16.xpose.msra.mxu0 0
        %722 = vmatprep.subr.bf16.mxu0 0
        %723 = vmatpush1.bf16.xpose.msra.mxu0 0
        %724 = vmatprep.subr.bf16.mxu0 0
        %725 = vmatpush1.bf16.xpose.msra.mxu0 0
        %726 = vmatprep.subr.bf16.mxu0 0
        %727 = vmatpush1.bf16.xpose.msra.mxu0 0
        %728 = vmatprep.subr.bf16.mxu0 0
        %729 = vmatpush1.bf16.xpose.msra.mxu0 0
        %730 = vmatprep.subr.bf16.mxu0 0
        %731 = vmatpush1.bf16.xpose.msra.mxu0 0
        %732 = vmatprep.subr.bf16.mxu0 0
        %733 = vmatpush1.bf16.xpose.msra.mxu0 0
        %734 = vmatprep.subr.bf16.mxu0 0
        %735 = vmatpush1.bf16.xpose.msra.mxu0 0
        %736 = vmatprep.subr.bf16.mxu0 0
        %737 = vmatpush1.bf16.xpose.msra.mxu0 0
        %738 = vmatprep.subr.bf16.mxu0 0
        %739 = vmatpush1.bf16.xpose.msra.mxu0 0
        %740 = vmatprep.subr.bf16.mxu0 0
        %741 = vmatpush1.bf16.xpose.msra.mxu0 0
        %742 = vmatprep.subr.bf16.mxu0 0
        %743 = vmatpush1.bf16.xpose.msra.mxu0 0
        %744 = vmatprep.mubr.bf16.mxu0 0
        %745 = vmatmul.mubr.bf16.gmra.mrb[0].mxu0 %v707
        %v746 = vpop.f32.mrb[0].mxu0
        %v747 = vadd.f32 0.0, %v746
        %v748 = vpop.f32.mrb[0].mxu0
        %v749 = vpop.f32.mrb[0].mxu0
        %v750 = vpop.f32.mrb[0].mxu0
        %751 = vdwg.mxu0
        %v752 = vsel %vm591, %v747, -inf
        %753 = vmax.xlane.f32.xlu0 %v752
        %v754 = vpop.xlane.xlu0 %753
        %v755 = vsub.f32 %v747, %v754
        %v756 = vmul.f32 %v755, 1.442695
        %v757 = vpow.pop %v756
        %v758 = vsel %vm591, %v757, 0.0
        %759 = vadd.xlane.f32.xlu0 %v758
        %v760 = vpop.xlane.xlu0 %759
        %v761 = vpack.c.bf16 %v757, %v757
        %762 = vrot.lane.b32.xlu0 %v587, 56
        %v763 = vpop.permute.xlu0 %762
        %v765 = vsel %vm591, %v761, 0
        %v768 = vsel %vm653, %v763, 0
        %770 = vmatprep.subr.bf16.mxu0 0
        %771 = vmatpush1.bf16.msra.mxu0 %v768
        %772 = vmatprep.subr.bf16.mxu0 0
        %773 = vmatpush1.bf16.msra.mxu0 0
        %774 = vmatprep.subr.bf16.mxu0 0
        %775 = vmatpush1.bf16.msra.mxu0 0
        %776 = vmatprep.subr.bf16.mxu0 0
        %777 = vmatpush1.bf16.msra.mxu0 0
        %778 = vmatprep.subr.bf16.mxu0 0
        %779 = vmatpush1.bf16.msra.mxu0 0
        %780 = vmatprep.subr.bf16.mxu0 0
        %781 = vmatpush1.bf16.msra.mxu0 0
        %782 = vmatprep.subr.bf16.mxu0 0
        %783 = vmatpush1.bf16.msra.mxu0 0
        %784 = vmatprep.subr.bf16.mxu0 0
        %785 = vmatpush1.bf16.msra.mxu0 0
        %786 = vmatprep.subr.bf16.mxu0 0
        %787 = vmatpush1.bf16.msra.mxu0 0
        %788 = vmatprep.subr.bf16.mxu0 0
        %789 = vmatpush1.bf16.msra.mxu0 0
        %790 = vmatprep.subr.bf16.mxu0 0
        %791 = vmatpush1.bf16.msra.mxu0 0
        %792 = vmatprep.subr.bf16.mxu0 0
        %793 = vmatpush1.bf16.msra.mxu0 0
        %794 = vmatprep.subr.bf16.mxu0 0
        %795 = vmatpush1.bf16.msra.mxu0 0
        %796 = vmatprep.subr.bf16.mxu0 0
        %797 = vmatpush1.bf16.msra.mxu0 0
        %798 = vmatprep.subr.bf16.mxu0 0
        %799 = vmatpush1.bf16.msra.mxu0 0
        %800 = vmatprep.subr.bf16.mxu0 0
        %801 = vmatpush1.bf16.msra.mxu0 0
        %802 = vmatprep.mubr.bf16.mxu0 0
        %803 = vmatmul.mubr.bf16.gmra.mrb[0].mxu0 %v765
        %v804 = vpop.f32.mrb[0].mxu0
        %v805 = vadd.f32 0.0, %v804
        %v806 = vpop.f32.mrb[0].mxu0
        %v807 = vpop.f32.mrb[0].mxu0
        %v808 = vpop.f32.mrb[0].mxu0
        %809 = vdwg.mxu0
        %v810 = vrcp.pop %v760
        %v811 = vmul.f32 %v805, %v810
        %v812 = vpack.c.bf16 %v811, %v811
        %v814 = vunpack.c.l.b16 %v812
        %v815 = vpack.c.b16 %v814, %v814
        %816 = vrot.lane.b32.xlu0 %v815, 8
        %v817 = vpop.permute.xlu0 %816
        %vm819 = vcmask 126016
        %820 = vst.msk [vmem:[#allocation2] sm:$0xf] %vm819, %v817
        %821 = vrot.lane.b32.xlu0 %v587, 112
        %v822 = vpop.permute.xlu0 %821
        %823 = vrot.lane.b32.xlu0 %v587, 80
        %v824 = vpop.permute.xlu0 %823
        %v826 = vsel %vm591, %v822, 0
        %v829 = vsel %vm591, %v824, 0
        %831 = vmatprep.subr.bf16.mxu0 0
        %832 = vmatpush1.bf16.xpose.msra.mxu0 %v829
        %833 = vmatprep.subr.bf16.mxu0 0
        %834 = vmatpush1.bf16.xpose.msra.mxu0 0
        %835 = vmatprep.subr.bf16.mxu0 0
        %836 = vmatpush1.bf16.xpose.msra.mxu0 0
        %837 = vmatprep.subr.bf16.mxu0 0
        %838 = vmatpush1.bf16.xpose.msra.mxu0 0
        %839 = vmatprep.subr.bf16.mxu0 0
        %840 = vmatpush1.bf16.xpose.msra.mxu0 0
        %841 = vmatprep.subr.bf16.mxu0 0
        %842 = vmatpush1.bf16.xpose.msra.mxu0 0
        %843 = vmatprep.subr.bf16.mxu0 0
        %844 = vmatpush1.bf16.xpose.msra.mxu0 0
        %845 = vmatprep.subr.bf16.mxu0 0
        %846 = vmatpush1.bf16.xpose.msra.mxu0 0
        %847 = vmatprep.subr.bf16.mxu0 0
        %848 = vmatpush1.bf16.xpose.msra.mxu0 0
        %849 = vmatprep.subr.bf16.mxu0 0
        %850 = vmatpush1.bf16.xpose.msra.mxu0 0
        %851 = vmatprep.subr.bf16.mxu0 0
        %852 = vmatpush1.bf16.xpose.msra.mxu0 0
        %853 = vmatprep.subr.bf16.mxu0 0
        %854 = vmatpush1.bf16.xpose.msra.mxu0 0
        %855 = vmatprep.subr.bf16.mxu0 0
        %856 = vmatpush1.bf16.xpose.msra.mxu0 0
        %857 = vmatprep.subr.bf16.mxu0 0
        %858 = vmatpush1.bf16.xpose.msra.mxu0 0
        %859 = vmatprep.subr.bf16.mxu0 0
        %860 = vmatpush1.bf16.xpose.msra.mxu0 0
        %861 = vmatprep.subr.bf16.mxu0 0
        %862 = vmatpush1.bf16.xpose.msra.mxu0 0
        %863 = vmatprep.mubr.bf16.mxu0 0
        %864 = vmatmul.mubr.bf16.gmra.mrb[0].mxu0 %v826
        %v865 = vpop.f32.mrb[0].mxu0
        %v866 = vadd.f32 0.0, %v865
        %v867 = vpop.f32.mrb[0].mxu0
        %v868 = vpop.f32.mrb[0].mxu0
        %v869 = vpop.f32.mrb[0].mxu0
        %870 = vdwg.mxu0
        %v871 = vsel %vm591, %v866, -inf
        %872 = vmax.xlane.f32.xlu0 %v871
        %v873 = vpop.xlane.xlu0 %872
        %v874 = vsub.f32 %v866, %v873
        %v875 = vmul.f32 %v874, 1.442695
        %v876 = vpow.pop %v875
        %v877 = vsel %vm591, %v876, 0.0
        %878 = vadd.xlane.f32.xlu0 %v877
        %v879 = vpop.xlane.xlu0 %878
        %v880 = vpack.c.bf16 %v876, %v876
        %881 = vrot.lane.b32.xlu0 %v587, 48
        %v882 = vpop.permute.xlu0 %881
        %v884 = vsel %vm591, %v880, 0
        %v887 = vsel %vm653, %v882, 0
        %889 = vmatprep.subr.bf16.mxu0 0
        %890 = vmatpush1.bf16.msra.mxu0 %v887
        %891 = vmatprep.subr.bf16.mxu0 0
        %892 = vmatpush1.bf16.msra.mxu0 0
        %893 = vmatprep.subr.bf16.mxu0 0
        %894 = vmatpush1.bf16.msra.mxu0 0
        %895 = vmatprep.subr.bf16.mxu0 0
        %896 = vmatpush1.bf16.msra.mxu0 0
        %897 = vmatprep.subr.bf16.mxu0 0
        %898 = vmatpush1.bf16.msra.mxu0 0
        %899 = vmatprep.subr.bf16.mxu0 0
        %900 = vmatpush1.bf16.msra.mxu0 0
        %901 = vmatprep.subr.bf16.mxu0 0
        %902 = vmatpush1.bf16.msra.mxu0 0
        %903 = vmatprep.subr.bf16.mxu0 0
        %904 = vmatpush1.bf16.msra.mxu0 0
        %905 = vmatprep.subr.bf16.mxu0 0
        %906 = vmatpush1.bf16.msra.mxu0 0
        %907 = vmatprep.subr.bf16.mxu0 0
        %908 = vmatpush1.bf16.msra.mxu0 0
        %909 = vmatprep.subr.bf16.mxu0 0
        %910 = vmatpush1.bf16.msra.mxu0 0
        %911 = vmatprep.subr.bf16.mxu0 0
        %912 = vmatpush1.bf16.msra.mxu0 0
        %913 = vmatprep.subr.bf16.mxu0 0
        %914 = vmatpush1.bf16.msra.mxu0 0
        %915 = vmatprep.subr.bf16.mxu0 0
        %916 = vmatpush1.bf16.msra.mxu0 0
        %917 = vmatprep.subr.bf16.mxu0 0
        %918 = vmatpush1.bf16.msra.mxu0 0
        %919 = vmatprep.subr.bf16.mxu0 0
        %920 = vmatpush1.bf16.msra.mxu0 0
        %921 = vmatprep.mubr.bf16.mxu0 0
        %922 = vmatmul.mubr.bf16.gmra.mrb[0].mxu0 %v884
        %v923 = vpop.f32.mrb[0].mxu0
        %v924 = vadd.f32 0.0, %v923
        %v925 = vpop.f32.mrb[0].mxu0
        %v926 = vpop.f32.mrb[0].mxu0
        %v927 = vpop.f32.mrb[0].mxu0
        %928 = vdwg.mxu0
        %v929 = vrcp.pop %v879
        %v930 = vmul.f32 %v924, %v929
        %v931 = vpack.c.bf16 %v930, %v930
        %v933 = vunpack.c.l.b16 %v931
        %v934 = vpack.c.b16 %v933, %v933
        %935 = vrot.lane.b32.xlu0 %v934, 16
        %v936 = vpop.permute.xlu0 %935
        %vm938 = vcmask 191616
        %939 = vst.msk [vmem:[#allocation2] sm:$0xf] %vm938, %v936
        %940 = vrot.lane.b32.xlu0 %v587, 104
        %v941 = vpop.permute.xlu0 %940
        %942 = vrot.lane.b32.xlu0 %v587, 72
        %v943 = vpop.permute.xlu0 %942
        %v945 = vsel %vm591, %v941, 0
        %v948 = vsel %vm591, %v943, 0
        %950 = vmatprep.subr.bf16.mxu0 0
        %951 = vmatpush1.bf16.xpose.msra.mxu0 %v948
        %952 = vmatprep.subr.bf16.mxu0 0
        %953 = vmatpush1.bf16.xpose.msra.mxu0 0
        %954 = vmatprep.subr.bf16.mxu0 0
        %955 = vmatpush1.bf16.xpose.msra.mxu0 0
        %956 = vmatprep.subr.bf16.mxu0 0
        %957 = vmatpush1.bf16.xpose.msra.mxu0 0
        %958 = vmatprep.subr.bf16.mxu0 0
        %959 = vmatpush1.bf16.xpose.msra.mxu0 0
        %960 = vmatprep.subr.bf16.mxu0 0
        %961 = vmatpush1.bf16.xpose.msra.mxu0 0
        %962 = vmatprep.subr.bf16.mxu0 0
        %963 = vmatpush1.bf16.xpose.msra.mxu0 0
        %964 = vmatprep.subr.bf16.mxu0 0
        %965 = vmatpush1.bf16.xpose.msra.mxu0 0
        %966 = vmatprep.subr.bf16.mxu0 0
        %967 = vmatpush1.bf16.xpose.msra.mxu0 0
        %968 = vmatprep.subr.bf16.mxu0 0
        %969 = vmatpush1.bf16.xpose.msra.mxu0 0
        %970 = vmatprep.subr.bf16.mxu0 0
        %971 = vmatpush1.bf16.xpose.msra.mxu0 0
        %972 = vmatprep.subr.bf16.mxu0 0
        %973 = vmatpush1.bf16.xpose.msra.mxu0 0
        %974 = vmatprep.subr.bf16.mxu0 0
        %975 = vmatpush1.bf16.xpose.msra.mxu0 0
        %976 = vmatprep.subr.bf16.mxu0 0
        %977 = vmatpush1.bf16.xpose.msra.mxu0 0
        %978 = vmatprep.subr.bf16.mxu0 0
        %979 = vmatpush1.bf16.xpose.msra.mxu0 0
        %980 = vmatprep.subr.bf16.mxu0 0
        %981 = vmatpush1.bf16.xpose.msra.mxu0 0
        %982 = vmatprep.mubr.bf16.mxu0 0
        %983 = vmatmul.mubr.bf16.gmra.mrb[0].mxu0 %v945
        %v984 = vpop.f32.mrb[0].mxu0
        %v985 = vadd.f32 0.0, %v984
        %v986 = vpop.f32.mrb[0].mxu0
        %v987 = vpop.f32.mrb[0].mxu0
        %v988 = vpop.f32.mrb[0].mxu0
        %989 = vdwg.mxu0
        %v990 = vsel %vm591, %v985, -inf
        %991 = vmax.xlane.f32.xlu0 %v990
        %v992 = vpop.xlane.xlu0 %991
        %v993 = vsub.f32 %v985, %v992
        %v994 = vmul.f32 %v993, 1.442695
        %v995 = vpow.pop %v994
        %v996 = vsel %vm591, %v995, 0.0
        %997 = vadd.xlane.f32.xlu0 %v996
        %v998 = vpop.xlane.xlu0 %997
        %v999 = vpack.c.bf16 %v995, %v995
        %1000 = vrot.lane.b32.xlu0 %v587, 40
        %v1001 = vpop.permute.xlu0 %1000
        %v1003 = vsel %vm591, %v999, 0
        %v1006 = vsel %vm653, %v1001, 0
        %1008 = vmatprep.subr.bf16.mxu0 0
        %1009 = vmatpush1.bf16.msra.mxu0 %v1006
        %1010 = vmatprep.subr.bf16.mxu0 0
        %1011 = vmatpush1.bf16.msra.mxu0 0
        %1012 = vmatprep.subr.bf16.mxu0 0
        %1013 = vmatpush1.bf16.msra.mxu0 0
        %1014 = vmatprep.subr.bf16.mxu0 0
        %1015 = vmatpush1.bf16.msra.mxu0 0
        %1016 = vmatprep.subr.bf16.mxu0 0
        %1017 = vmatpush1.bf16.msra.mxu0 0
        %1018 = vmatprep.subr.bf16.mxu0 0
        %1019 = vmatpush1.bf16.msra.mxu0 0
        %1020 = vmatprep.subr.bf16.mxu0 0
        %1021 = vmatpush1.bf16.msra.mxu0 0
        %1022 = vmatprep.subr.bf16.mxu0 0
        %1023 = vmatpush1.bf16.msra.mxu0 0
        %1024 = vmatprep.subr.bf16.mxu0 0
        %1025 = vmatpush1.bf16.msra.mxu0 0
        %1026 = vmatprep.subr.bf16.mxu0 0
        %1027 = vmatpush1.bf16.msra.mxu0 0
        %1028 = vmatprep.subr.bf16.mxu0 0
        %1029 = vmatpush1.bf16.msra.mxu0 0
        %1030 = vmatprep.subr.bf16.mxu0 0
        %1031 = vmatpush1.bf16.msra.mxu0 0
        %1032 = vmatprep.subr.bf16.mxu0 0
        %1033 = vmatpush1.bf16.msra.mxu0 0
        %1034 = vmatprep.subr.bf16.mxu0 0
        %1035 = vmatpush1.bf16.msra.mxu0 0
        %1036 = vmatprep.subr.bf16.mxu0 0
        %1037 = vmatpush1.bf16.msra.mxu0 0
        %1038 = vmatprep.subr.bf16.mxu0 0
        %1039 = vmatpush1.bf16.msra.mxu0 0
        %1040 = vmatprep.mubr.bf16.mxu0 0
        %1041 = vmatmul.mubr.bf16.gmra.mrb[0].mxu0 %v1003
        %v1042 = vpop.f32.mrb[0].mxu0
        %v1043 = vadd.f32 0.0, %v1042
        %v1044 = vpop.f32.mrb[0].mxu0
        %v1045 = vpop.f32.mrb[0].mxu0
        %v1046 = vpop.f32.mrb[0].mxu0
        %1047 = vdwg.mxu0
        %v1048 = vrcp.pop %v998
        %v1049 = vmul.f32 %v1043, %v1048
        %v1050 = vpack.c.bf16 %v1049, %v1049
        %v1052 = vunpack.c.l.b16 %v1050
        %v1053 = vpack.c.b16 %v1052, %v1052
        %1054 = vrot.lane.b32.xlu0 %v1053, 24
        %v1055 = vpop.permute.xlu0 %1054
        %vm1057 = vcmask 257216
        %1058 = vst.msk [vmem:[#allocation2] sm:$0xf] %vm1057, %v1055
        %v1059 = vld [vmem:[#allocation2] sm:$0xf]
        %v1060 = vld [vmem:[%s5] sm:$0xf]
        %v1061 = vld [vmem:[%s5 + $0x4] sm:$0xf]
        %v1062 = vld [vmem:[%s5 + $0x8] sm:$0xf]
        %v1063 = vld [vmem:[%s5 + $0xc] sm:$0xf]
        %v1068 = vunpack.c.l.b16 %v1060
        %v1069 = vunpack.c.l.b16 %v1061
        %v1070 = vunpack.c.l.b16 %v1062
        %v1071 = vunpack.c.l.b16 %v1063
        %v1072 = vpack.c.b16 %v1069, %v1068
        %v1073 = vpack.c.b16 %v1071, %v1070
        %v1077 = vsel %vm491, %v1059, 0
        %1079 = vmatprep.subr.bf16.mxu0 0
        %1080 = vmatpush1.bf16.msra.mxu0 %v1072
        %1081 = vmatprep.subr.bf16.mxu0 0
        %1082 = vmatpush1.bf16.msra.mxu0 %v1073
        %1083 = vmatprep.subr.bf16.mxu0 0
        %1084 = vmatpush1.bf16.msra.mxu0 0
        %1085 = vmatprep.subr.bf16.mxu0 0
        %1086 = vmatpush1.bf16.msra.mxu0 0
        %1087 = vmatprep.subr.bf16.mxu0 0
        %1088 = vmatpush1.bf16.msra.mxu0 0
        %1089 = vmatprep.subr.bf16.mxu0 0
        %1090 = vmatpush1.bf16.msra.mxu0 0
        %1091 = vmatprep.subr.bf16.mxu0 0
        %1092 = vmatpush1.bf16.msra.mxu0 0
        %1093 = vmatprep.subr.bf16.mxu0 0
        %1094 = vmatpush1.bf16.msra.mxu0 0
        %1095 = vmatprep.subr.bf16.mxu0 0
        %1096 = vmatpush1.bf16.msra.mxu0 0
        %1097 = vmatprep.subr.bf16.mxu0 0
        %1098 = vmatpush1.bf16.msra.mxu0 0
        %1099 = vmatprep.subr.bf16.mxu0 0
        %1100 = vmatpush1.bf16.msra.mxu0 0
        %1101 = vmatprep.subr.bf16.mxu0 0
        %1102 = vmatpush1.bf16.msra.mxu0 0
        %1103 = vmatprep.subr.bf16.mxu0 0
        %1104 = vmatpush1.bf16.msra.mxu0 0
        %1105 = vmatprep.subr.bf16.mxu0 0
        %1106 = vmatpush1.bf16.msra.mxu0 0
        %1107 = vmatprep.subr.bf16.mxu0 0
        %1108 = vmatpush1.bf16.msra.mxu0 0
        %1109 = vmatprep.subr.bf16.mxu0 0
        %1110 = vmatpush1.bf16.msra.mxu0 0
        %1111 = vmatprep.mubr.bf16.mxu0 0
        %1112 = vmatmul.mubr.bf16.gmra.mrb[0].mxu0 %v1077
        %v1113 = vpop.f32.mrb[0].mxu0
        %v1114 = vadd.f32 0.0, %v1113
        %v1115 = vpop.f32.mrb[0].mxu0
        %v1116 = vpop.f32.mrb[0].mxu0
        %v1117 = vpop.f32.mrb[0].mxu0
        %1118 = vdwg.mxu0
        %v1119 = vadd.f32 %v488, %v1114
        %v1120 = vld [vmem:[#allocation6] sm:$0x1]
        %v1122 = vlaneseq
        %v1123 = vshrl.u32 %v1122, 7
        %v1124 = vsub.s32 0, %v1123
        %v1125 = vrot.slane %v1120, %v1124
        %v1127 = vadd.f32 %v1119, %v1125
        %v1128 = vld [vmem:[#allocation8] sm:$0x1]
        %v1129 = vld [vmem:[#allocation9] sm:$0x1]
        %v1130 = vsel %vm491, %v1127, 0.0
        %1131 = vadd.xlane.f32.xlu0 %v1130
        %v1132 = vpop.xlane.xlu0 %1131
        %v1133 = vmul.f32 %v1132, %v495
        %v1134 = vsub.f32 %v1127, %v1133
        %v1135 = vmul.f32 %v1134, %v1134
        %v1136 = vsel %vm491, %v1135, 0.0
        %1137 = vadd.xlane.f32.xlu0 %v1136
        %v1138 = vpop.xlane.xlu0 %1137
        %v1139 = vmul.f32 %v1138, %v495
        %v1140 = vadd.f32 %v1139, 1e-05
        %v1141 = vrsqrt.pop %v1140
        %v1142 = vmul.f32 %v1134, %v1141
        %v1144 = vlaneseq
        %v1145 = vshrl.u32 %v1144, 7
        %v1146 = vsub.s32 0, %v1145
        %v1147 = vrot.slane %v1128, %v1146
        %v1149 = vmul.f32 %v1142, %v1147
        %v1151 = vlaneseq
        %v1152 = vshrl.u32 %v1151, 7
        %v1153 = vsub.s32 0, %v1152
        %v1154 = vrot.slane %v1129, %v1153
        %v1156 = vadd.f32 %v1149, %v1154
        %v1157 = vpack.c.bf16 %v1156, %v1156
        %v1158 = vld [vmem:[%s9] sm:$0xf]
        %v1159 = vld [vmem:[%s9 + $0x4] sm:$0xf]
        %v1160 = vld [vmem:[%s9 + $0x8] sm:$0xf]
        %v1161 = vld [vmem:[%s9 + $0xc] sm:$0xf]
        %v1162 = vld [vmem:[%s10] sm:$0x1]
        %v1164 = vlaneseq
        %v1165 = vshrl.u32 %v1164, 7
        %v1166 = vsub.s32 0, %v1165
        %v1167 = vrot.slane %v1162, %v1166
        %v1173 = vunpack.c.l.b16 %v1158
        %v1174 = vunpack.c.l.b16 %v1159
        %v1175 = vunpack.c.l.b16 %v1160
        %v1176 = vunpack.c.l.b16 %v1161
        %v1177 = vpack.c.b16 %v1174, %v1173
        %v1178 = vpack.c.b16 %v1176, %v1175
        %v1182 = vsel %vm491, %v1157, 0
        %1184 = vmatprep.subr.bf16.mxu0 0
        %1185 = vmatpush1.bf16.msra.mxu0 %v1177
        %1186 = vmatprep.subr.bf16.mxu0 0
        %1187 = vmatpush1.bf16.msra.mxu0 %v1178
        %1188 = vmatprep.subr.bf16.mxu0 0
        %1189 = vmatpush1.bf16.msra.mxu0 0
        %1190 = vmatprep.subr.bf16.mxu0 0
        %1191 = vmatpush1.bf16.msra.mxu0 0
        %1192 = vmatprep.subr.bf16.mxu0 0
        %1193 = vmatpush1.bf16.msra.mxu0 0
        %1194 = vmatprep.subr.bf16.mxu0 0
        %1195 = vmatpush1.bf16.msra.mxu0 0
        %1196 = vmatprep.subr.bf16.mxu0 0
        %1197 = vmatpush1.bf16.msra.mxu0 0
        %1198 = vmatprep.subr.bf16.mxu0 0
        %1199 = vmatpush1.bf16.msra.mxu0 0
        %1200 = vmatprep.subr.bf16.mxu0 0
        %1201 = vmatpush1.bf16.msra.mxu0 0
        %1202 = vmatprep.subr.bf16.mxu0 0
        %1203 = vmatpush1.bf16.msra.mxu0 0
        %1204 = vmatprep.subr.bf16.mxu0 0
        %1205 = vmatpush1.bf16.msra.mxu0 0
        %1206 = vmatprep.subr.bf16.mxu0 0
        %1207 = vmatpush1.bf16.msra.mxu0 0
        %1208 = vmatprep.subr.bf16.mxu0 0
        %1209 = vmatpush1.bf16.msra.mxu0 0
        %1210 = vmatprep.subr.bf16.mxu0 0
        %1211 = vmatpush1.bf16.msra.mxu0 0
        %1212 = vmatprep.subr.bf16.mxu0 0
        %1213 = vmatpush1.bf16.msra.mxu0 0
        %1214 = vmatprep.subr.bf16.mxu0 0
        %1215 = vmatpush1.bf16.msra.mxu0 0
        %1216 = vmatprep.mubr.bf16.mxu0 0
        %1217 = vmatmul.mubr.bf16.gmra.mrb[0].mxu0 %v1182
        %v1218 = vpop.f32.mrb[0].mxu0
        %v1219 = vadd.f32 %v1167, %v1218
        %v1220 = vpop.f32.mrb[0].mxu0
        %v1221 = vpop.f32.mrb[0].mxu0
        %v1222 = vpop.f32.mrb[0].mxu0
        %1223 = vdwg.mxu0
        %v1224 = vmul.f32 %v1219, 0.5
        %v1225 = vmul.f32 %v1219, 0.70710677
        %v1226 = verf.f32.pop %v1225
        %v1227 = vadd.f32 %v1226, 1.0
        %v1228 = vmul.f32 %v1224, %v1227
        %v1229 = vpack.c.bf16 %v1228, %v1228
        %v1230 = vld [vmem:[%s11] sm:$0xf]
        %v1231 = vld [vmem:[%s11 + $0x4] sm:$0xf]
        %v1232 = vld [vmem:[%s11 + $0x8] sm:$0xf]
        %v1233 = vld [vmem:[%s11 + $0xc] sm:$0xf]
        %v1234 = vld [vmem:[%s11 + $0x10] sm:$0xf]
        %v1235 = vld [vmem:[%s11 + $0x14] sm:$0xf]
        %v1236 = vld [vmem:[%s11 + $0x18] sm:$0xf]
        %v1237 = vld [vmem:[%s11 + $0x1c] sm:$0xf]
        %v1246 = vunpack.c.l.b16 %v1230
        %v1247 = vunpack.c.l.b16 %v1231
        %v1248 = vunpack.c.l.b16 %v1232
        %v1249 = vunpack.c.l.b16 %v1233
        %v1250 = vunpack.c.l.b16 %v1234
        %v1251 = vunpack.c.l.b16 %v1235
        %v1252 = vunpack.c.l.b16 %v1236
        %v1253 = vunpack.c.l.b16 %v1237
        %v1254 = vpack.c.b16 %v1247, %v1246
        %v1255 = vpack.c.b16 %v1249, %v1248
        %v1256 = vpack.c.b16 %v1251, %v1250
        %v1257 = vpack.c.b16 %v1253, %v1252
        %vm1262 = vcmask 523264
        %v1264 = vsel %vm1262, %v1229, 0
        %1266 = vmatprep.subr.bf16.mxu0 0
        %1267 = vmatpush1.bf16.msra.mxu0 %v1254
        %1268 = vmatprep.subr.bf16.mxu0 0
        %1269 = vmatpush1.bf16.msra.mxu0 %v1255
        %1270 = vmatprep.subr.bf16.mxu0 0
        %1271 = vmatpush1.bf16.msra.mxu0 %v1256
        %1272 = vmatprep.subr.bf16.mxu0 0
        %1273 = vmatpush1.bf16.msra.mxu0 %v1257
        %1274 = vmatprep.subr.bf16.mxu0 0
        %1275 = vmatpush1.bf16.msra.mxu0 0
        %1276 = vmatprep.subr.bf16.mxu0 0
        %1277 = vmatpush1.bf16.msra.mxu0 0
        %1278 = vmatprep.subr.bf16.mxu0 0
        %1279 = vmatpush1.bf16.msra.mxu0 0
        %1280 = vmatprep.subr.bf16.mxu0 0
        %1281 = vmatpush1.bf16.msra.mxu0 0
        %1282 = vmatprep.subr.bf16.mxu0 0
        %1283 = vmatpush1.bf16.msra.mxu0 0
        %1284 = vmatprep.subr.bf16.mxu0 0
        %1285 = vmatpush1.bf16.msra.mxu0 0
        %1286 = vmatprep.subr.bf16.mxu0 0
        %1287 = vmatpush1.bf16.msra.mxu0 0
        %1288 = vmatprep.subr.bf16.mxu0 0
        %1289 = vmatpush1.bf16.msra.mxu0 0
        %1290 = vmatprep.subr.bf16.mxu0 0
        %1291 = vmatpush1.bf16.msra.mxu0 0
        %1292 = vmatprep.subr.bf16.mxu0 0
        %1293 = vmatpush1.bf16.msra.mxu0 0
        %1294 = vmatprep.subr.bf16.mxu0 0
        %1295 = vmatpush1.bf16.msra.mxu0 0
        %1296 = vmatprep.subr.bf16.mxu0 0
        %1297 = vmatpush1.bf16.msra.mxu0 0
        %1298 = vmatprep.mubr.bf16.mxu0 0
        %1299 = vmatmul.mubr.bf16.gmra.mrb[0].mxu0 %v1264
        %v1300 = vpop.f32.mrb[0].mxu0
        %v1301 = vadd.f32 0.0, %v1300
        %v1302 = vpop.f32.mrb[0].mxu0
        %v1303 = vpop.f32.mrb[0].mxu0
        %v1304 = vpop.f32.mrb[0].mxu0
        %1305 = vdwg.mxu0
        %v1306 = vadd.f32 %v1127, %v1301
        %v1307 = vld [vmem:[%s12] sm:$0x1]
        %v1309 = vlaneseq
        %v1310 = vshrl.u32 %v1309, 7
        %v1311 = vsub.s32 0, %v1310
        %v1312 = vrot.slane %v1307, %v1311
        %v1314 = vadd.f32 %v1306, %v1312
        %1315 = vst.msk [vmem:[%s482] sm:$0xff] %vm491, %v1314
        %s1316 = sand.u32 %s316, 1
        %s1317 = scalar_lea.sflag [#allocation5], %s1316
        %s1318 = sand.u32 %s316, 1
        %s1319 = smul.addr %s1318, 8
        %s1320 = scalar_lea.vmem [#allocation11], %s1319
        // Predicated region
        $region89: #{tpu_custom_call.1} parent=71 // pred_check
          %p1321 = pneg %p326
        $region90: #{tpu_custom_call.1} parent=71 // pred_check_branch
          %1323 = sbr.rel (%p1321) target = $region92
        $region91: #{tpu_custom_call.1} parent=71 // pred_region
          %s1325 = ssub.s32 128, 128
          %1326 = vsyncadd %s1317, %s1325
          %s1327 = smul.addr %s30, 128
          %s1328 = scalar_lea.hbm %s13, %s1327
          %s1330 = sshll.u32 %s1320, 4
          %s1331 = int_to_ptr.vmem [resolvable:$true] %s1330
          %1333 = dma.vmem_to_hbm [thread:$0]  %s1331, 128, %s1328, %s1317
        $region92: #{tpu_custom_call.1} parent=71 // pred_fallthru
          _
      $region72: #{tpu_custom_call.1} parent=5 // pred_fallthru
        _
      %p1334 = scmp.le.s32.totalorder 2, %s25
      // Predicated region
      $region93: #{tpu_custom_call.1} parent=5 // pred_check
        %p1335 = pneg %p1334
      $region94: #{tpu_custom_call.1} parent=5 // pred_check_branch
        %1337 = sbr.rel (%p1335) target = $region96
      $region95: #{tpu_custom_call.1} parent=5 // pred_region
        %s1338 = ssub.s32 %s25, 2
        // Predicated region
        $region97: #{tpu_custom_call.1} parent=95 // pred_check
          %p1339 = pneg %p332
        $region98: #{tpu_custom_call.1} parent=95 // pred_check_branch
          %1341 = sbr.rel (%p1339) target = $region100
        $region99: #{tpu_custom_call.1} parent=95 // pred_region
          %s1342 = sand.u32 %s317, 1
          %s1343 = scalar_lea.sflag [#allocation5], %s1342
          %s1344 = sand.u32 %s317, 1
          %s1345 = smul.addr %s1344, 8
          %s1346 = scalar_lea.vmem [#allocation11], %s1345
          %1347 = dma.done %s1343, 128
        $region100: #{tpu_custom_call.1} parent=95 // pred_fallthru
          _
      $region96: #{tpu_custom_call.1} parent=5 // pred_fallthru
        _
    $region6: #{tpu_custom_call.1} parent=1 // loop_footer
      %s29 = sadd.s32 1, %s25
    $region7: #{tpu_custom_call.1} parent=1 // loop_footer_branch
      %24 = sbr.rel target = $region3
    $region8: #{tpu_custom_call.1} parent=1 // loop_exit
      _
    %1348 = vsyncpa [#allocation4], 1
    %s1349 = scalar_lea.sflag [#allocation4], 1
    %1350 = vsyncpa %s1349, 1
    %1351 = vsyncpa [#allocation7], 1
    %1352 = vsyncpa [#allocation10], 1
    %1353 = vsyncpa [#allocation5], 1
    %s1354 = scalar_lea.sflag [#allocation5], 1
    %1355 = vsyncpa %s1354, 1

</llo_original>
